<compile_context>
chip_gen: v6e
topology: v6e:2x2x1
jax: 0.10.0
libtpu: 0.0.40
codegen_flags: <defaults>
</compile_context>

<pallas_src>
import functools

import jax
import jax.numpy as jnp
from jax.experimental import pallas as pl
from jax.experimental.pallas import tpu as pltpu

LANES = 128


def _attention_kernel(wg_ref, wx_ref, bgx_ref, wpsi_ref, bpsi_ref,
                      g_ref, x_ref, out_ref, *, chunk):
    """One (batch-block, spatial-tile) grid step.

    g_ref:    (bb, F_g, rt, 128) VMEM     x_ref / out_ref: (bb, F_l, rt, 128) VMEM
    wg_ref:   (F_g, F_int) SMEM           wx_ref:          (F_l, F_int) SMEM
    bgx_ref:  (F_int,)     SMEM (bg+bx)   wpsi_ref:        (F_int,)     SMEM
    bpsi_ref: (1,)         SMEM
    """
    bb, F_g, rt, L = g_ref.shape
    F_l = x_ref.shape[1]
    F_int = bgx_ref.shape[0]

    # Hoist every scalar weight read (SMEM -> sreg) out of the row-chunk loop.
    wg = [[wg_ref[cg, ci] for ci in range(F_int)] for cg in range(F_g)]
    wx = [[wx_ref[cl, ci] for ci in range(F_int)] for cl in range(F_l)]
    bgx = [bgx_ref[ci] for ci in range(F_int)]
    wpsi = [wpsi_ref[ci] for ci in range(F_int)]
    bpsi = bpsi_ref[0]

    def gate_rows(bi, row0, nrows):
        rows = pl.ds(row0, nrows)
        # Load this chunk of every channel exactly once (bounded vreg live-set).
        g_ch = [g_ref[bi, c, rows, :] for c in range(F_g)]
        x_ch = [x_ref[bi, c, rows, :] for c in range(F_l)]

        # psi logits accumulated over the F_int intermediate channels on the fly.
        logits = jnp.full((nrows, L), bpsi, dtype=jnp.float32)
        for ci in range(F_int):
            acc = g_ch[0] * wg[0][ci]
            for cg in range(1, F_g):
                acc = acc + g_ch[cg] * wg[cg][ci]
            for cl in range(F_l):
                acc = acc + x_ch[cl] * wx[cl][ci]
            p = jnp.maximum(acc + bgx[ci], 0.0)           # relu(g1 + x1)
            logits = logits + p * wpsi[ci]                # 1x1 psi conv -> 1 channel

        # Sigmoid via EUP: exp + approx reciprocal, + 2 Newton steps for f32 accuracy.
        z = jnp.maximum(logits, -80.0)                    # keep exp() finite
        e = jnp.exp(-z)
        d = 1.0 + e
        r = pl.reciprocal(d, approx=True)
        r = r * (2.0 - d * r)
        r = r * (2.0 - d * r)                             # r = sigmoid(logits)

        # Gate the skip connection (broadcast over channels).
        for cl in range(F_l):
            out_ref[bi, cl, rows, :] = (x_ch[cl] * r).astype(out_ref.dtype)

    n_full = rt // chunk
    tail = rt - n_full * chunk
    for bi in range(bb):                                   # static; usually bb == 1
        if n_full > 0:
            @pl.loop(0, n_full)
            def _(step, bi=bi):
                row0 = pl.multiple_of(step * chunk, chunk)
                gate_rows(bi, row0, chunk)
        if tail:
            gate_rows(bi, n_full * chunk, tail)


def _choose_tiling(B, R, rt_cap):
    """Pick (batch-block bb, spatial rows-per-tile rt)."""
    rt_cap = max(8, (rt_cap // 8) * 8)
    rt = R if R <= rt_cap else rt_cap                      # rt==R or a multiple of 8
    # v7x has 2 TensorCores: with a single batch & single spatial tile, split the
    # spatial axis so there are >= 2 "parallel" grid steps.
    if B == 1 and R <= rt and R >= 16:
        rt = (((R + 1) // 2) + 7) // 8 * 8
    # Tiny feature maps: fold batches into one grid step to amortize per-step
    # overhead, keeping >= 2 total grid steps (and B % bb == 0).
    bb = 1
    if R <= rt and B >= 4 and B % 2 == 0:
        bb = B // 2
    return bb, rt


@functools.partial(jax.jit, static_argnames=("rt_cap", "chunk"))
def attention_block_pallas(g, x, wg_eff, bg, wx_eff, bx, wpsi_eff, bpsi,
                           *, rt_cap=512, chunk=16):
    """g, x: NCHW float32.  Returns NCHW float32 (x * psi)."""
    B, F_g, H, W = g.shape
    _, F_l, _, _ = x.shape
    F_int = wg_eff.shape[1]

    S = H * W
    pad = (-S) % LANES
    # Pure reshape of NCHW (no transpose; no extra HBM traffic when pad == 0).
    g_r = g.reshape(B, F_g, S)
    x_r = x.reshape(B, F_l, S)
    if pad:
        g_r = jnp.pad(g_r, ((0, 0), (0, 0), (0, pad)))
        x_r = jnp.pad(x_r, ((0, 0), (0, 0), (0, pad)))
    Sp = S + pad
    R = Sp // LANES
    g4 = g_r.reshape(B, F_g, R, LANES)
    x4 = x_r.reshape(B, F_l, R, LANES)

    bb, rt = _choose_tiling(B, R, rt_cap)
    grid = (B // bb, pl.cdiv(R, rt))

    # Explicit VMEM budget covering the double-buffered block footprint (+ headroom),
    # kept well under v7x's 64 MiB physical VMEM.
    blk_bytes = 4 * bb * rt * LANES * (F_g + 2 * F_l)
    vmem_limit = int(min(64 << 20, max(16 << 20, 2 * blk_bytes + (4 << 20))))

    bgx = (bg + bx).astype(jnp.float32)
    wpsi_v = wpsi_eff.reshape(F_int).astype(jnp.float32)
    bpsi_v = bpsi.reshape(1).astype(jnp.float32)

    smem = pl.BlockSpec(memory_space=pltpu.MemorySpace.SMEM)

    def tile(C):
        return pl.BlockSpec((bb, C, rt, LANES), lambda b, r: (b, 0, r, 0))

    out4 = pl.pallas_call(
        functools.partial(_attention_kernel, chunk=chunk),
        out_shape=jax.ShapeDtypeStruct((B, F_l, R, LANES), x.dtype),
        grid_spec=pltpu.PrefetchScalarGridSpec(
            num_scalar_prefetch=0,
            grid=grid,
            in_specs=[smem, smem, smem, smem, smem, tile(F_g), tile(F_l)],
            out_specs=tile(F_l),
        ),
        compiler_params=pltpu.CompilerParams(
            dimension_semantics=("parallel", "parallel"),
            vmem_limit_bytes=vmem_limit),
    )(wg_eff.astype(jnp.float32), wx_eff.astype(jnp.float32),
      bgx, wpsi_v, bpsi_v, g4, x4)

    out = out4.reshape(B, F_l, Sp)
    if pad:
        out = out[:, :, :S]
    return out.reshape(B, F_l, H, W)


def fold_bn(weight_oi, gamma, beta, running_mean, running_var, eps=1e-5):
    """Fold inference-mode BatchNorm into a 1x1-conv weight of shape (C_in, C_out)."""
    scale = gamma / jnp.sqrt(running_var + eps)            # (C_out,)
    w_eff = weight_oi * scale[None, :]                      # (C_in, C_out)
    bias = beta - running_mean * scale                      # (C_out,)
    return w_eff, bias


def reference_jax(g, x, wg_eff, bg, wx_eff, bx, wpsi_eff, bpsi):
    """Pure-JAX reference (same folded-BN semantics), NCHW in / NCHW out."""
    hi = jax.lax.Precision.HIGHEST
    g1 = jnp.einsum('bchw,cf->bfhw', g, wg_eff, precision=hi) + bg[None, :, None, None]
    x1 = jnp.einsum('bchw,cf->bfhw', x, wx_eff, precision=hi) + bx[None, :, None, None]
    p = jnp.maximum(g1 + x1, 0.0)
    a = jax.nn.sigmoid(jnp.einsum('bchw,co->bohw', p, wpsi_eff, precision=hi)
                       + bpsi[None, :, None, None])
    return x * a


if __name__ == "__main__":
    # Small, deterministic configuration consistent with the module.
    B, F_g, F_l, F_int = 2, 4, 4, 8
    key = jax.random.PRNGKey(0)
    keys = jax.random.split(key, 13)

    # Conv weights (PyTorch Conv2d 1x1, no bias), stored here as (C_in, C_out).
    wg = jax.random.normal(keys[2], (F_g, F_int), jnp.float32) * 0.2
    wx = jax.random.normal(keys[3], (F_l, F_int), jnp.float32) * 0.2
    wpsi = jax.random.normal(keys[4], (F_int, 1), jnp.float32) * 0.2

    # BatchNorm parameters (eval mode, running statistics).
    gamma_g = 1.0 + 0.1 * jax.random.normal(keys[5], (F_int,), jnp.float32)
    beta_g = 0.1 * jax.random.normal(keys[6], (F_int,), jnp.float32)
    mean_g = 0.05 * jax.random.normal(keys[7], (F_int,), jnp.float32)
    var_g = jnp.abs(1.0 + 0.1 * jax.random.normal(keys[8], (F_int,), jnp.float32))

    gamma_x = jnp.ones((F_int,), jnp.float32)
    beta_x = jnp.zeros((F_int,), jnp.float32)
    mean_x = 0.05 * jax.random.normal(keys[9], (F_int,), jnp.float32)
    var_x = jnp.abs(1.0 + 0.1 * jax.random.normal(keys[10], (F_int,), jnp.float32))

    gamma_p = jnp.ones((1,), jnp.float32)
    beta_p = jnp.zeros((1,), jnp.float32)
    mean_p = jnp.zeros((1,), jnp.float32)
    var_p = jnp.ones((1,), jnp.float32)

    wg_eff, bg = fold_bn(wg, gamma_g, beta_g, mean_g, var_g)
    wx_eff, bx = fold_bn(wx, gamma_x, beta_x, mean_x, var_x)
    wpsi_eff, bpsi = fold_bn(wpsi, gamma_p, beta_p, mean_p, var_p)

    # Two spatial sizes: the tiny 16x16 case (single chunk) and 64x48 (exercises the
    # pl.loop chunking + tail path).  Both keep 2 parallel grid steps.
    test_keys = [(keys[0], keys[1], 16, 16), (keys[11], keys[12], 64, 48)]
    for kg, kx, H, W in test_keys:
        g = jax.random.normal(kg, (B, F_g, H, W), jnp.float32)
        x = jax.random.normal(kx, (B, F_l, H, W), jnp.float32)

        out = attention_block_pallas(g, x, wg_eff, bg, wx_eff, bx, wpsi_eff, bpsi)
        out = jax.block_until_ready(out)

        ref = reference_jax(g, x, wg_eff, bg, wx_eff, bx, wpsi_eff, bpsi)
        assert out.shape == (B, F_l, H, W)
        assert jnp.allclose(out, ref, atol=1e-5, rtol=1e-5), \
            f"mismatch vs pure-JAX reference at H={H} W={W}"

    print("KERNEL_OK")
</pallas_src>

<mosaic_0001>
module attributes {stable_mosaic.version = 11 : i64} {
  func.func @_attention_kernel(%arg0: i32, %arg1: i32, %arg2: memref<4x8xf32, #tpu.memory_space<smem>>, %arg3: memref<4x8xf32, #tpu.memory_space<smem>>, %arg4: memref<8xf32, #tpu.memory_space<smem>>, %arg5: memref<8xf32, #tpu.memory_space<smem>>, %arg6: memref<1xf32, #tpu.memory_space<smem>>, %arg7: memref<1x4x2x128xf32, #tpu.memory_space<vmem>>, %arg8: memref<1x4x2x128xf32, #tpu.memory_space<vmem>>, %arg9: memref<1x4x2x128xf32, #tpu.memory_space<vmem>>) attributes {dimension_semantics = [#tpu.dimension_semantics<parallel>, #tpu.dimension_semantics<parallel>], iteration_bounds = array<i64: 2, 1>, scalar_prefetch = 0 : i64, scratch_operands = 0 : i64, tpu.core_type = #tpu.core_type<tc>, window_params = [{transform_indices = @transform_0, window_bounds = array<i64: 4, 8>}, {transform_indices = @transform_1, window_bounds = array<i64: 4, 8>}, {transform_indices = @transform_2, window_bounds = array<i64: 8>}, {transform_indices = @transform_3, window_bounds = array<i64: 8>}, {transform_indices = @transform_4, window_bounds = array<i64: 1>}, {transform_indices = @transform_5, window_bounds = array<i64: 1, 4, 2, 128>}, {transform_indices = @transform_6, window_bounds = array<i64: 1, 4, 2, 128>}, {transform_indices = @transform_7, window_bounds = array<i64: 1, 4, 2, 128>}]} {
    %c0 = arith.constant 0 : index
    %c0_0 = arith.constant 0 : index
    %0 = memref.load %arg2[%c0, %c0_0] : memref<4x8xf32, #tpu.memory_space<smem>>
    %c0_1 = arith.constant 0 : index
    %c1 = arith.constant 1 : index
    %1 = memref.load %arg2[%c0_1, %c1] : memref<4x8xf32, #tpu.memory_space<smem>>
    %c0_2 = arith.constant 0 : index
    %c2 = arith.constant 2 : index
    %2 = memref.load %arg2[%c0_2, %c2] : memref<4x8xf32, #tpu.memory_space<smem>>
    %c0_3 = arith.constant 0 : index
    %c3 = arith.constant 3 : index
    %3 = memref.load %arg2[%c0_3, %c3] : memref<4x8xf32, #tpu.memory_space<smem>>
    %c0_4 = arith.constant 0 : index
    %c4 = arith.constant 4 : index
    %4 = memref.load %arg2[%c0_4, %c4] : memref<4x8xf32, #tpu.memory_space<smem>>
    %c0_5 = arith.constant 0 : index
    %c5 = arith.constant 5 : index
    %5 = memref.load %arg2[%c0_5, %c5] : memref<4x8xf32, #tpu.memory_space<smem>>
    %c0_6 = arith.constant 0 : index
    %c6 = arith.constant 6 : index
    %6 = memref.load %arg2[%c0_6, %c6] : memref<4x8xf32, #tpu.memory_space<smem>>
    %c0_7 = arith.constant 0 : index
    %c7 = arith.constant 7 : index
    %7 = memref.load %arg2[%c0_7, %c7] : memref<4x8xf32, #tpu.memory_space<smem>>
    %c1_8 = arith.constant 1 : index
    %c0_9 = arith.constant 0 : index
    %8 = memref.load %arg2[%c1_8, %c0_9] : memref<4x8xf32, #tpu.memory_space<smem>>
    %c1_10 = arith.constant 1 : index
    %c1_11 = arith.constant 1 : index
    %9 = memref.load %arg2[%c1_10, %c1_11] : memref<4x8xf32, #tpu.memory_space<smem>>
    %c1_12 = arith.constant 1 : index
    %c2_13 = arith.constant 2 : index
    %10 = memref.load %arg2[%c1_12, %c2_13] : memref<4x8xf32, #tpu.memory_space<smem>>
    %c1_14 = arith.constant 1 : index
    %c3_15 = arith.constant 3 : index
    %11 = memref.load %arg2[%c1_14, %c3_15] : memref<4x8xf32, #tpu.memory_space<smem>>
    %c1_16 = arith.constant 1 : index
    %c4_17 = arith.constant 4 : index
    %12 = memref.load %arg2[%c1_16, %c4_17] : memref<4x8xf32, #tpu.memory_space<smem>>
    %c1_18 = arith.constant 1 : index
    %c5_19 = arith.constant 5 : index
    %13 = memref.load %arg2[%c1_18, %c5_19] : memref<4x8xf32, #tpu.memory_space<smem>>
    %c1_20 = arith.constant 1 : index
    %c6_21 = arith.constant 6 : index
    %14 = memref.load %arg2[%c1_20, %c6_21] : memref<4x8xf32, #tpu.memory_space<smem>>
    %c1_22 = arith.constant 1 : index
    %c7_23 = arith.constant 7 : index
    %15 = memref.load %arg2[%c1_22, %c7_23] : memref<4x8xf32, #tpu.memory_space<smem>>
    %c2_24 = arith.constant 2 : index
    %c0_25 = arith.constant 0 : index
    %16 = memref.load %arg2[%c2_24, %c0_25] : memref<4x8xf32, #tpu.memory_space<smem>>
    %c2_26 = arith.constant 2 : index
    %c1_27 = arith.constant 1 : index
    %17 = memref.load %arg2[%c2_26, %c1_27] : memref<4x8xf32, #tpu.memory_space<smem>>
    %c2_28 = arith.constant 2 : index
    %c2_29 = arith.constant 2 : index
    %18 = memref.load %arg2[%c2_28, %c2_29] : memref<4x8xf32, #tpu.memory_space<smem>>
    %c2_30 = arith.constant 2 : index
    %c3_31 = arith.constant 3 : index
    %19 = memref.load %arg2[%c2_30, %c3_31] : memref<4x8xf32, #tpu.memory_space<smem>>
    %c2_32 = arith.constant 2 : index
    %c4_33 = arith.constant 4 : index
    %20 = memref.load %arg2[%c2_32, %c4_33] : memref<4x8xf32, #tpu.memory_space<smem>>
    %c2_34 = arith.constant 2 : index
    %c5_35 = arith.constant 5 : index
    %21 = memref.load %arg2[%c2_34, %c5_35] : memref<4x8xf32, #tpu.memory_space<smem>>
    %c2_36 = arith.constant 2 : index
    %c6_37 = arith.constant 6 : index
    %22 = memref.load %arg2[%c2_36, %c6_37] : memref<4x8xf32, #tpu.memory_space<smem>>
    %c2_38 = arith.constant 2 : index
    %c7_39 = arith.constant 7 : index
    %23 = memref.load %arg2[%c2_38, %c7_39] : memref<4x8xf32, #tpu.memory_space<smem>>
    %c3_40 = arith.constant 3 : index
    %c0_41 = arith.constant 0 : index
    %24 = memref.load %arg2[%c3_40, %c0_41] : memref<4x8xf32, #tpu.memory_space<smem>>
    %c3_42 = arith.constant 3 : index
    %c1_43 = arith.constant 1 : index
    %25 = memref.load %arg2[%c3_42, %c1_43] : memref<4x8xf32, #tpu.memory_space<smem>>
    %c3_44 = arith.constant 3 : index
    %c2_45 = arith.constant 2 : index
    %26 = memref.load %arg2[%c3_44, %c2_45] : memref<4x8xf32, #tpu.memory_space<smem>>
    %c3_46 = arith.constant 3 : index
    %c3_47 = arith.constant 3 : index
    %27 = memref.load %arg2[%c3_46, %c3_47] : memref<4x8xf32, #tpu.memory_space<smem>>
    %c3_48 = arith.constant 3 : index
    %c4_49 = arith.constant 4 : index
    %28 = memref.load %arg2[%c3_48, %c4_49] : memref<4x8xf32, #tpu.memory_space<smem>>
    %c3_50 = arith.constant 3 : index
    %c5_51 = arith.constant 5 : index
    %29 = memref.load %arg2[%c3_50, %c5_51] : memref<4x8xf32, #tpu.memory_space<smem>>
    %c3_52 = arith.constant 3 : index
    %c6_53 = arith.constant 6 : index
    %30 = memref.load %arg2[%c3_52, %c6_53] : memref<4x8xf32, #tpu.memory_space<smem>>
    %c3_54 = arith.constant 3 : index
    %c7_55 = arith.constant 7 : index
    %31 = memref.load %arg2[%c3_54, %c7_55] : memref<4x8xf32, #tpu.memory_space<smem>>
    %c0_56 = arith.constant 0 : index
    %c0_57 = arith.constant 0 : index
    %32 = memref.load %arg3[%c0_56, %c0_57] : memref<4x8xf32, #tpu.memory_space<smem>>
    %c0_58 = arith.constant 0 : index
    %c1_59 = arith.constant 1 : index
    %33 = memref.load %arg3[%c0_58, %c1_59] : memref<4x8xf32, #tpu.memory_space<smem>>
    %c0_60 = arith.constant 0 : index
    %c2_61 = arith.constant 2 : index
    %34 = memref.load %arg3[%c0_60, %c2_61] : memref<4x8xf32, #tpu.memory_space<smem>>
    %c0_62 = arith.constant 0 : index
    %c3_63 = arith.constant 3 : index
    %35 = memref.load %arg3[%c0_62, %c3_63] : memref<4x8xf32, #tpu.memory_space<smem>>
    %c0_64 = arith.constant 0 : index
    %c4_65 = arith.constant 4 : index
    %36 = memref.load %arg3[%c0_64, %c4_65] : memref<4x8xf32, #tpu.memory_space<smem>>
    %c0_66 = arith.constant 0 : index
    %c5_67 = arith.constant 5 : index
    %37 = memref.load %arg3[%c0_66, %c5_67] : memref<4x8xf32, #tpu.memory_space<smem>>
    %c0_68 = arith.constant 0 : index
    %c6_69 = arith.constant 6 : index
    %38 = memref.load %arg3[%c0_68, %c6_69] : memref<4x8xf32, #tpu.memory_space<smem>>
    %c0_70 = arith.constant 0 : index
    %c7_71 = arith.constant 7 : index
    %39 = memref.load %arg3[%c0_70, %c7_71] : memref<4x8xf32, #tpu.memory_space<smem>>
    %c1_72 = arith.constant 1 : index
    %c0_73 = arith.constant 0 : index
    %40 = memref.load %arg3[%c1_72, %c0_73] : memref<4x8xf32, #tpu.memory_space<smem>>
    %c1_74 = arith.constant 1 : index
    %c1_75 = arith.constant 1 : index
    %41 = memref.load %arg3[%c1_74, %c1_75] : memref<4x8xf32, #tpu.memory_space<smem>>
    %c1_76 = arith.constant 1 : index
    %c2_77 = arith.constant 2 : index
    %42 = memref.load %arg3[%c1_76, %c2_77] : memref<4x8xf32, #tpu.memory_space<smem>>
    %c1_78 = arith.constant 1 : index
    %c3_79 = arith.constant 3 : index
    %43 = memref.load %arg3[%c1_78, %c3_79] : memref<4x8xf32, #tpu.memory_space<smem>>
    %c1_80 = arith.constant 1 : index
    %c4_81 = arith.constant 4 : index
    %44 = memref.load %arg3[%c1_80, %c4_81] : memref<4x8xf32, #tpu.memory_space<smem>>
    %c1_82 = arith.constant 1 : index
    %c5_83 = arith.constant 5 : index
    %45 = memref.load %arg3[%c1_82, %c5_83] : memref<4x8xf32, #tpu.memory_space<smem>>
    %c1_84 = arith.constant 1 : index
    %c6_85 = arith.constant 6 : index
    %46 = memref.load %arg3[%c1_84, %c6_85] : memref<4x8xf32, #tpu.memory_space<smem>>
    %c1_86 = arith.constant 1 : index
    %c7_87 = arith.constant 7 : index
    %47 = memref.load %arg3[%c1_86, %c7_87] : memref<4x8xf32, #tpu.memory_space<smem>>
    %c2_88 = arith.constant 2 : index
    %c0_89 = arith.constant 0 : index
    %48 = memref.load %arg3[%c2_88, %c0_89] : memref<4x8xf32, #tpu.memory_space<smem>>
    %c2_90 = arith.constant 2 : index
    %c1_91 = arith.constant 1 : index
    %49 = memref.load %arg3[%c2_90, %c1_91] : memref<4x8xf32, #tpu.memory_space<smem>>
    %c2_92 = arith.constant 2 : index
    %c2_93 = arith.constant 2 : index
    %50 = memref.load %arg3[%c2_92, %c2_93] : memref<4x8xf32, #tpu.memory_space<smem>>
    %c2_94 = arith.constant 2 : index
    %c3_95 = arith.constant 3 : index
    %51 = memref.load %arg3[%c2_94, %c3_95] : memref<4x8xf32, #tpu.memory_space<smem>>
    %c2_96 = arith.constant 2 : index
    %c4_97 = arith.constant 4 : index
    %52 = memref.load %arg3[%c2_96, %c4_97] : memref<4x8xf32, #tpu.memory_space<smem>>
    %c2_98 = arith.constant 2 : index
    %c5_99 = arith.constant 5 : index
    %53 = memref.load %arg3[%c2_98, %c5_99] : memref<4x8xf32, #tpu.memory_space<smem>>
    %c2_100 = arith.constant 2 : index
    %c6_101 = arith.constant 6 : index
    %54 = memref.load %arg3[%c2_100, %c6_101] : memref<4x8xf32, #tpu.memory_space<smem>>
    %c2_102 = arith.constant 2 : index
    %c7_103 = arith.constant 7 : index
    %55 = memref.load %arg3[%c2_102, %c7_103] : memref<4x8xf32, #tpu.memory_space<smem>>
    %c3_104 = arith.constant 3 : index
    %c0_105 = arith.constant 0 : index
    %56 = memref.load %arg3[%c3_104, %c0_105] : memref<4x8xf32, #tpu.memory_space<smem>>
    %c3_106 = arith.constant 3 : index
    %c1_107 = arith.constant 1 : index
    %57 = memref.load %arg3[%c3_106, %c1_107] : memref<4x8xf32, #tpu.memory_space<smem>>
    %c3_108 = arith.constant 3 : index
    %c2_109 = arith.constant 2 : index
    %58 = memref.load %arg3[%c3_108, %c2_109] : memref<4x8xf32, #tpu.memory_space<smem>>
    %c3_110 = arith.constant 3 : index
    %c3_111 = arith.constant 3 : index
    %59 = memref.load %arg3[%c3_110, %c3_111] : memref<4x8xf32, #tpu.memory_space<smem>>
    %c3_112 = arith.constant 3 : index
    %c4_113 = arith.constant 4 : index
    %60 = memref.load %arg3[%c3_112, %c4_113] : memref<4x8xf32, #tpu.memory_space<smem>>
    %c3_114 = arith.constant 3 : index
    %c5_115 = arith.constant 5 : index
    %61 = memref.load %arg3[%c3_114, %c5_115] : memref<4x8xf32, #tpu.memory_space<smem>>
    %c3_116 = arith.constant 3 : index
    %c6_117 = arith.constant 6 : index
    %62 = memref.load %arg3[%c3_116, %c6_117] : memref<4x8xf32, #tpu.memory_space<smem>>
    %c3_118 = arith.constant 3 : index
    %c7_119 = arith.constant 7 : index
    %63 = memref.load %arg3[%c3_118, %c7_119] : memref<4x8xf32, #tpu.memory_space<smem>>
    %c0_120 = arith.constant 0 : index
    %64 = memref.load %arg4[%c0_120] : memref<8xf32, #tpu.memory_space<smem>>
    %c1_121 = arith.constant 1 : index
    %65 = memref.load %arg4[%c1_121] : memref<8xf32, #tpu.memory_space<smem>>
    %c2_122 = arith.constant 2 : index
    %66 = memref.load %arg4[%c2_122] : memref<8xf32, #tpu.memory_space<smem>>
    %c3_123 = arith.constant 3 : index
    %67 = memref.load %arg4[%c3_123] : memref<8xf32, #tpu.memory_space<smem>>
    %c4_124 = arith.constant 4 : index
    %68 = memref.load %arg4[%c4_124] : memref<8xf32, #tpu.memory_space<smem>>
    %c5_125 = arith.constant 5 : index
    %69 = memref.load %arg4[%c5_125] : memref<8xf32, #tpu.memory_space<smem>>
    %c6_126 = arith.constant 6 : index
    %70 = memref.load %arg4[%c6_126] : memref<8xf32, #tpu.memory_space<smem>>
    %c7_127 = arith.constant 7 : index
    %71 = memref.load %arg4[%c7_127] : memref<8xf32, #tpu.memory_space<smem>>
    %c0_128 = arith.constant 0 : index
    %72 = memref.load %arg5[%c0_128] : memref<8xf32, #tpu.memory_space<smem>>
    %c1_129 = arith.constant 1 : index
    %73 = memref.load %arg5[%c1_129] : memref<8xf32, #tpu.memory_space<smem>>
    %c2_130 = arith.constant 2 : index
    %74 = memref.load %arg5[%c2_130] : memref<8xf32, #tpu.memory_space<smem>>
    %c3_131 = arith.constant 3 : index
    %75 = memref.load %arg5[%c3_131] : memref<8xf32, #tpu.memory_space<smem>>
    %c4_132 = arith.constant 4 : index
    %76 = memref.load %arg5[%c4_132] : memref<8xf32, #tpu.memory_space<smem>>
    %c5_133 = arith.constant 5 : index
    %77 = memref.load %arg5[%c5_133] : memref<8xf32, #tpu.memory_space<smem>>
    %c6_134 = arith.constant 6 : index
    %78 = memref.load %arg5[%c6_134] : memref<8xf32, #tpu.memory_space<smem>>
    %c7_135 = arith.constant 7 : index
    %79 = memref.load %arg5[%c7_135] : memref<8xf32, #tpu.memory_space<smem>>
    %c0_136 = arith.constant 0 : index
    %80 = memref.load %arg6[%c0_136] : memref<1xf32, #tpu.memory_space<smem>>
    %c0_137 = arith.constant 0 : index
    %c0_138 = arith.constant 0 : index
    %c0_139 = arith.constant 0 : index
    %c0_140 = arith.constant 0 : index
    %81 = vector.load %arg7[%c0_137, %c0_138, %c0_139, %c0_140] : memref<1x4x2x128xf32, #tpu.memory_space<vmem>>, vector<1x1x2x128xf32>
    %82 = vector.shape_cast %81 : vector<1x1x2x128xf32> to vector<2x128xf32>
    %c0_141 = arith.constant 0 : index
    %c1_142 = arith.constant 1 : index
    %c0_143 = arith.constant 0 : index
    %c0_144 = arith.constant 0 : index
    %83 = vector.load %arg7[%c0_141, %c1_142, %c0_143, %c0_144] : memref<1x4x2x128xf32, #tpu.memory_space<vmem>>, vector<1x1x2x128xf32>
    %84 = vector.shape_cast %83 : vector<1x1x2x128xf32> to vector<2x128xf32>
    %c0_145 = arith.constant 0 : index
    %c2_146 = arith.constant 2 : index
    %c0_147 = arith.constant 0 : index
    %c0_148 = arith.constant 0 : index
    %85 = vector.load %arg7[%c0_145, %c2_146, %c0_147, %c0_148] : memref<1x4x2x128xf32, #tpu.memory_space<vmem>>, vector<1x1x2x128xf32>
    %86 = vector.shape_cast %85 : vector<1x1x2x128xf32> to vector<2x128xf32>
    %c0_149 = arith.constant 0 : index
    %c3_150 = arith.constant 3 : index
    %c0_151 = arith.constant 0 : index
    %c0_152 = arith.constant 0 : index
    %87 = vector.load %arg7[%c0_149, %c3_150, %c0_151, %c0_152] : memref<1x4x2x128xf32, #tpu.memory_space<vmem>>, vector<1x1x2x128xf32>
    %88 = vector.shape_cast %87 : vector<1x1x2x128xf32> to vector<2x128xf32>
    %c0_153 = arith.constant 0 : index
    %c0_154 = arith.constant 0 : index
    %c0_155 = arith.constant 0 : index
    %c0_156 = arith.constant 0 : index
    %89 = vector.load %arg8[%c0_153, %c0_154, %c0_155, %c0_156] : memref<1x4x2x128xf32, #tpu.memory_space<vmem>>, vector<1x1x2x128xf32>
    %90 = vector.shape_cast %89 : vector<1x1x2x128xf32> to vector<2x128xf32>
    %c0_157 = arith.constant 0 : index
    %c1_158 = arith.constant 1 : index
    %c0_159 = arith.constant 0 : index
    %c0_160 = arith.constant 0 : index
    %91 = vector.load %arg8[%c0_157, %c1_158, %c0_159, %c0_160] : memref<1x4x2x128xf32, #tpu.memory_space<vmem>>, vector<1x1x2x128xf32>
    %92 = vector.shape_cast %91 : vector<1x1x2x128xf32> to vector<2x128xf32>
    %c0_161 = arith.constant 0 : index
    %c2_162 = arith.constant 2 : index
    %c0_163 = arith.constant 0 : index
    %c0_164 = arith.constant 0 : index
    %93 = vector.load %arg8[%c0_161, %c2_162, %c0_163, %c0_164] : memref<1x4x2x128xf32, #tpu.memory_space<vmem>>, vector<1x1x2x128xf32>
    %94 = vector.shape_cast %93 : vector<1x1x2x128xf32> to vector<2x128xf32>
    %c0_165 = arith.constant 0 : index
    %c3_166 = arith.constant 3 : index
    %c0_167 = arith.constant 0 : index
    %c0_168 = arith.constant 0 : index
    %95 = vector.load %arg8[%c0_165, %c3_166, %c0_167, %c0_168] : memref<1x4x2x128xf32, #tpu.memory_space<vmem>>, vector<1x1x2x128xf32>
    %96 = vector.shape_cast %95 : vector<1x1x2x128xf32> to vector<2x128xf32>
    %97 = vector.broadcast %80 : f32 to vector<2x128xf32>
    %98 = vector.broadcast %0 : f32 to vector<2x128xf32>
    %99 = arith.mulf %82, %98 : vector<2x128xf32>
    %100 = vector.broadcast %8 : f32 to vector<2x128xf32>
    %101 = arith.mulf %84, %100 : vector<2x128xf32>
    %102 = arith.addf %99, %101 : vector<2x128xf32>
    %103 = vector.broadcast %16 : f32 to vector<2x128xf32>
    %104 = arith.mulf %86, %103 : vector<2x128xf32>
    %105 = arith.addf %102, %104 : vector<2x128xf32>
    %106 = vector.broadcast %24 : f32 to vector<2x128xf32>
    %107 = arith.mulf %88, %106 : vector<2x128xf32>
    %108 = arith.addf %105, %107 : vector<2x128xf32>
    %109 = vector.broadcast %32 : f32 to vector<2x128xf32>
    %110 = arith.mulf %90, %109 : vector<2x128xf32>
    %111 = arith.addf %108, %110 : vector<2x128xf32>
    %112 = vector.broadcast %40 : f32 to vector<2x128xf32>
    %113 = arith.mulf %92, %112 : vector<2x128xf32>
    %114 = arith.addf %111, %113 : vector<2x128xf32>
    %115 = vector.broadcast %48 : f32 to vector<2x128xf32>
    %116 = arith.mulf %94, %115 : vector<2x128xf32>
    %117 = arith.addf %114, %116 : vector<2x128xf32>
    %118 = vector.broadcast %56 : f32 to vector<2x128xf32>
    %119 = arith.mulf %96, %118 : vector<2x128xf32>
    %120 = arith.addf %117, %119 : vector<2x128xf32>
    %121 = vector.broadcast %64 : f32 to vector<2x128xf32>
    %122 = arith.addf %120, %121 : vector<2x128xf32>
    %cst = arith.constant 0.000000e+00 : f32
    %123 = vector.broadcast %cst : f32 to vector<2x128xf32>
    %124 = arith.maximumf %122, %123 : vector<2x128xf32>
    %125 = vector.broadcast %72 : f32 to vector<2x128xf32>
    %126 = arith.mulf %124, %125 : vector<2x128xf32>
    %127 = arith.addf %97, %126 : vector<2x128xf32>
    %128 = vector.broadcast %1 : f32 to vector<2x128xf32>
    %129 = arith.mulf %82, %128 : vector<2x128xf32>
    %130 = vector.broadcast %9 : f32 to vector<2x128xf32>
    %131 = arith.mulf %84, %130 : vector<2x128xf32>
    %132 = arith.addf %129, %131 : vector<2x128xf32>
    %133 = vector.broadcast %17 : f32 to vector<2x128xf32>
    %134 = arith.mulf %86, %133 : vector<2x128xf32>
    %135 = arith.addf %132, %134 : vector<2x128xf32>
    %136 = vector.broadcast %25 : f32 to vector<2x128xf32>
    %137 = arith.mulf %88, %136 : vector<2x128xf32>
    %138 = arith.addf %135, %137 : vector<2x128xf32>
    %139 = vector.broadcast %33 : f32 to vector<2x128xf32>
    %140 = arith.mulf %90, %139 : vector<2x128xf32>
    %141 = arith.addf %138, %140 : vector<2x128xf32>
    %142 = vector.broadcast %41 : f32 to vector<2x128xf32>
    %143 = arith.mulf %92, %142 : vector<2x128xf32>
    %144 = arith.addf %141, %143 : vector<2x128xf32>
    %145 = vector.broadcast %49 : f32 to vector<2x128xf32>
    %146 = arith.mulf %94, %145 : vector<2x128xf32>
    %147 = arith.addf %144, %146 : vector<2x128xf32>
    %148 = vector.broadcast %57 : f32 to vector<2x128xf32>
    %149 = arith.mulf %96, %148 : vector<2x128xf32>
    %150 = arith.addf %147, %149 : vector<2x128xf32>
    %151 = vector.broadcast %65 : f32 to vector<2x128xf32>
    %152 = arith.addf %150, %151 : vector<2x128xf32>
    %cst_169 = arith.constant 0.000000e+00 : f32
    %153 = vector.broadcast %cst_169 : f32 to vector<2x128xf32>
    %154 = arith.maximumf %152, %153 : vector<2x128xf32>
    %155 = vector.broadcast %73 : f32 to vector<2x128xf32>
    %156 = arith.mulf %154, %155 : vector<2x128xf32>
    %157 = arith.addf %127, %156 : vector<2x128xf32>
    %158 = vector.broadcast %2 : f32 to vector<2x128xf32>
    %159 = arith.mulf %82, %158 : vector<2x128xf32>
    %160 = vector.broadcast %10 : f32 to vector<2x128xf32>
    %161 = arith.mulf %84, %160 : vector<2x128xf32>
    %162 = arith.addf %159, %161 : vector<2x128xf32>
    %163 = vector.broadcast %18 : f32 to vector<2x128xf32>
    %164 = arith.mulf %86, %163 : vector<2x128xf32>
    %165 = arith.addf %162, %164 : vector<2x128xf32>
    %166 = vector.broadcast %26 : f32 to vector<2x128xf32>
    %167 = arith.mulf %88, %166 : vector<2x128xf32>
    %168 = arith.addf %165, %167 : vector<2x128xf32>
    %169 = vector.broadcast %34 : f32 to vector<2x128xf32>
    %170 = arith.mulf %90, %169 : vector<2x128xf32>
    %171 = arith.addf %168, %170 : vector<2x128xf32>
    %172 = vector.broadcast %42 : f32 to vector<2x128xf32>
    %173 = arith.mulf %92, %172 : vector<2x128xf32>
    %174 = arith.addf %171, %173 : vector<2x128xf32>
    %175 = vector.broadcast %50 : f32 to vector<2x128xf32>
    %176 = arith.mulf %94, %175 : vector<2x128xf32>
    %177 = arith.addf %174, %176 : vector<2x128xf32>
    %178 = vector.broadcast %58 : f32 to vector<2x128xf32>
    %179 = arith.mulf %96, %178 : vector<2x128xf32>
    %180 = arith.addf %177, %179 : vector<2x128xf32>
    %181 = vector.broadcast %66 : f32 to vector<2x128xf32>
    %182 = arith.addf %180, %181 : vector<2x128xf32>
    %cst_170 = arith.constant 0.000000e+00 : f32
    %183 = vector.broadcast %cst_170 : f32 to vector<2x128xf32>
    %184 = arith.maximumf %182, %183 : vector<2x128xf32>
    %185 = vector.broadcast %74 : f32 to vector<2x128xf32>
    %186 = arith.mulf %184, %185 : vector<2x128xf32>
    %187 = arith.addf %157, %186 : vector<2x128xf32>
    %188 = vector.broadcast %3 : f32 to vector<2x128xf32>
    %189 = arith.mulf %82, %188 : vector<2x128xf32>
    %190 = vector.broadcast %11 : f32 to vector<2x128xf32>
    %191 = arith.mulf %84, %190 : vector<2x128xf32>
    %192 = arith.addf %189, %191 : vector<2x128xf32>
    %193 = vector.broadcast %19 : f32 to vector<2x128xf32>
    %194 = arith.mulf %86, %193 : vector<2x128xf32>
    %195 = arith.addf %192, %194 : vector<2x128xf32>
    %196 = vector.broadcast %27 : f32 to vector<2x128xf32>
    %197 = arith.mulf %88, %196 : vector<2x128xf32>
    %198 = arith.addf %195, %197 : vector<2x128xf32>
    %199 = vector.broadcast %35 : f32 to vector<2x128xf32>
    %200 = arith.mulf %90, %199 : vector<2x128xf32>
    %201 = arith.addf %198, %200 : vector<2x128xf32>
    %202 = vector.broadcast %43 : f32 to vector<2x128xf32>
    %203 = arith.mulf %92, %202 : vector<2x128xf32>
    %204 = arith.addf %201, %203 : vector<2x128xf32>
    %205 = vector.broadcast %51 : f32 to vector<2x128xf32>
    %206 = arith.mulf %94, %205 : vector<2x128xf32>
    %207 = arith.addf %204, %206 : vector<2x128xf32>
    %208 = vector.broadcast %59 : f32 to vector<2x128xf32>
    %209 = arith.mulf %96, %208 : vector<2x128xf32>
    %210 = arith.addf %207, %209 : vector<2x128xf32>
    %211 = vector.broadcast %67 : f32 to vector<2x128xf32>
    %212 = arith.addf %210, %211 : vector<2x128xf32>
    %cst_171 = arith.constant 0.000000e+00 : f32
    %213 = vector.broadcast %cst_171 : f32 to vector<2x128xf32>
    %214 = arith.maximumf %212, %213 : vector<2x128xf32>
    %215 = vector.broadcast %75 : f32 to vector<2x128xf32>
    %216 = arith.mulf %214, %215 : vector<2x128xf32>
    %217 = arith.addf %187, %216 : vector<2x128xf32>
    %218 = vector.broadcast %4 : f32 to vector<2x128xf32>
    %219 = arith.mulf %82, %218 : vector<2x128xf32>
    %220 = vector.broadcast %12 : f32 to vector<2x128xf32>
    %221 = arith.mulf %84, %220 : vector<2x128xf32>
    %222 = arith.addf %219, %221 : vector<2x128xf32>
    %223 = vector.broadcast %20 : f32 to vector<2x128xf32>
    %224 = arith.mulf %86, %223 : vector<2x128xf32>
    %225 = arith.addf %222, %224 : vector<2x128xf32>
    %226 = vector.broadcast %28 : f32 to vector<2x128xf32>
    %227 = arith.mulf %88, %226 : vector<2x128xf32>
    %228 = arith.addf %225, %227 : vector<2x128xf32>
    %229 = vector.broadcast %36 : f32 to vector<2x128xf32>
    %230 = arith.mulf %90, %229 : vector<2x128xf32>
    %231 = arith.addf %228, %230 : vector<2x128xf32>
    %232 = vector.broadcast %44 : f32 to vector<2x128xf32>
    %233 = arith.mulf %92, %232 : vector<2x128xf32>
    %234 = arith.addf %231, %233 : vector<2x128xf32>
    %235 = vector.broadcast %52 : f32 to vector<2x128xf32>
    %236 = arith.mulf %94, %235 : vector<2x128xf32>
    %237 = arith.addf %234, %236 : vector<2x128xf32>
    %238 = vector.broadcast %60 : f32 to vector<2x128xf32>
    %239 = arith.mulf %96, %238 : vector<2x128xf32>
    %240 = arith.addf %237, %239 : vector<2x128xf32>
    %241 = vector.broadcast %68 : f32 to vector<2x128xf32>
    %242 = arith.addf %240, %241 : vector<2x128xf32>
    %cst_172 = arith.constant 0.000000e+00 : f32
    %243 = vector.broadcast %cst_172 : f32 to vector<2x128xf32>
    %244 = arith.maximumf %242, %243 : vector<2x128xf32>
    %245 = vector.broadcast %76 : f32 to vector<2x128xf32>
    %246 = arith.mulf %244, %245 : vector<2x128xf32>
    %247 = arith.addf %217, %246 : vector<2x128xf32>
    %248 = vector.broadcast %5 : f32 to vector<2x128xf32>
    %249 = arith.mulf %82, %248 : vector<2x128xf32>
    %250 = vector.broadcast %13 : f32 to vector<2x128xf32>
    %251 = arith.mulf %84, %250 : vector<2x128xf32>
    %252 = arith.addf %249, %251 : vector<2x128xf32>
    %253 = vector.broadcast %21 : f32 to vector<2x128xf32>
    %254 = arith.mulf %86, %253 : vector<2x128xf32>
    %255 = arith.addf %252, %254 : vector<2x128xf32>
    %256 = vector.broadcast %29 : f32 to vector<2x128xf32>
    %257 = arith.mulf %88, %256 : vector<2x128xf32>
    %258 = arith.addf %255, %257 : vector<2x128xf32>
    %259 = vector.broadcast %37 : f32 to vector<2x128xf32>
    %260 = arith.mulf %90, %259 : vector<2x128xf32>
    %261 = arith.addf %258, %260 : vector<2x128xf32>
    %262 = vector.broadcast %45 : f32 to vector<2x128xf32>
    %263 = arith.mulf %92, %262 : vector<2x128xf32>
    %264 = arith.addf %261, %263 : vector<2x128xf32>
    %265 = vector.broadcast %53 : f32 to vector<2x128xf32>
    %266 = arith.mulf %94, %265 : vector<2x128xf32>
    %267 = arith.addf %264, %266 : vector<2x128xf32>
    %268 = vector.broadcast %61 : f32 to vector<2x128xf32>
    %269 = arith.mulf %96, %268 : vector<2x128xf32>
    %270 = arith.addf %267, %269 : vector<2x128xf32>
    %271 = vector.broadcast %69 : f32 to vector<2x128xf32>
    %272 = arith.addf %270, %271 : vector<2x128xf32>
    %cst_173 = arith.constant 0.000000e+00 : f32
    %273 = vector.broadcast %cst_173 : f32 to vector<2x128xf32>
    %274 = arith.maximumf %272, %273 : vector<2x128xf32>
    %275 = vector.broadcast %77 : f32 to vector<2x128xf32>
    %276 = arith.mulf %274, %275 : vector<2x128xf32>
    %277 = arith.addf %247, %276 : vector<2x128xf32>
    %278 = vector.broadcast %6 : f32 to vector<2x128xf32>
    %279 = arith.mulf %82, %278 : vector<2x128xf32>
    %280 = vector.broadcast %14 : f32 to vector<2x128xf32>
    %281 = arith.mulf %84, %280 : vector<2x128xf32>
    %282 = arith.addf %279, %281 : vector<2x128xf32>
    %283 = vector.broadcast %22 : f32 to vector<2x128xf32>
    %284 = arith.mulf %86, %283 : vector<2x128xf32>
    %285 = arith.addf %282, %284 : vector<2x128xf32>
    %286 = vector.broadcast %30 : f32 to vector<2x128xf32>
    %287 = arith.mulf %88, %286 : vector<2x128xf32>
    %288 = arith.addf %285, %287 : vector<2x128xf32>
    %289 = vector.broadcast %38 : f32 to vector<2x128xf32>
    %290 = arith.mulf %90, %289 : vector<2x128xf32>
    %291 = arith.addf %288, %290 : vector<2x128xf32>
    %292 = vector.broadcast %46 : f32 to vector<2x128xf32>
    %293 = arith.mulf %92, %292 : vector<2x128xf32>
    %294 = arith.addf %291, %293 : vector<2x128xf32>
    %295 = vector.broadcast %54 : f32 to vector<2x128xf32>
    %296 = arith.mulf %94, %295 : vector<2x128xf32>
    %297 = arith.addf %294, %296 : vector<2x128xf32>
    %298 = vector.broadcast %62 : f32 to vector<2x128xf32>
    %299 = arith.mulf %96, %298 : vector<2x128xf32>
    %300 = arith.addf %297, %299 : vector<2x128xf32>
    %301 = vector.broadcast %70 : f32 to vector<2x128xf32>
    %302 = arith.addf %300, %301 : vector<2x128xf32>
    %cst_174 = arith.constant 0.000000e+00 : f32
    %303 = vector.broadcast %cst_174 : f32 to vector<2x128xf32>
    %304 = arith.maximumf %302, %303 : vector<2x128xf32>
    %305 = vector.broadcast %78 : f32 to vector<2x128xf32>
    %306 = arith.mulf %304, %305 : vector<2x128xf32>
    %307 = arith.addf %277, %306 : vector<2x128xf32>
    %308 = vector.broadcast %7 : f32 to vector<2x128xf32>
    %309 = arith.mulf %82, %308 : vector<2x128xf32>
    %310 = vector.broadcast %15 : f32 to vector<2x128xf32>
    %311 = arith.mulf %84, %310 : vector<2x128xf32>
    %312 = arith.addf %309, %311 : vector<2x128xf32>
    %313 = vector.broadcast %23 : f32 to vector<2x128xf32>
    %314 = arith.mulf %86, %313 : vector<2x128xf32>
    %315 = arith.addf %312, %314 : vector<2x128xf32>
    %316 = vector.broadcast %31 : f32 to vector<2x128xf32>
    %317 = arith.mulf %88, %316 : vector<2x128xf32>
    %318 = arith.addf %315, %317 : vector<2x128xf32>
    %319 = vector.broadcast %39 : f32 to vector<2x128xf32>
    %320 = arith.mulf %90, %319 : vector<2x128xf32>
    %321 = arith.addf %318, %320 : vector<2x128xf32>
    %322 = vector.broadcast %47 : f32 to vector<2x128xf32>
    %323 = arith.mulf %92, %322 : vector<2x128xf32>
    %324 = arith.addf %321, %323 : vector<2x128xf32>
    %325 = vector.broadcast %55 : f32 to vector<2x128xf32>
    %326 = arith.mulf %94, %325 : vector<2x128xf32>
    %327 = arith.addf %324, %326 : vector<2x128xf32>
    %328 = vector.broadcast %63 : f32 to vector<2x128xf32>
    %329 = arith.mulf %96, %328 : vector<2x128xf32>
    %330 = arith.addf %327, %329 : vector<2x128xf32>
    %331 = vector.broadcast %71 : f32 to vector<2x128xf32>
    %332 = arith.addf %330, %331 : vector<2x128xf32>
    %cst_175 = arith.constant 0.000000e+00 : f32
    %333 = vector.broadcast %cst_175 : f32 to vector<2x128xf32>
    %334 = arith.maximumf %332, %333 : vector<2x128xf32>
    %335 = vector.broadcast %79 : f32 to vector<2x128xf32>
    %336 = arith.mulf %334, %335 : vector<2x128xf32>
    %337 = arith.addf %307, %336 : vector<2x128xf32>
    %cst_176 = arith.constant -8.000000e+01 : f32
    %338 = vector.broadcast %cst_176 : f32 to vector<2x128xf32>
    %339 = arith.maximumf %337, %338 : vector<2x128xf32>
    %cst_177 = arith.constant 0.000000e+00 : f32
    %340 = vector.broadcast %cst_177 : f32 to vector<2x128xf32>
    %341 = arith.subf %340, %339 : vector<2x128xf32>
    %342 = math.exp %341 : vector<2x128xf32>
    %cst_178 = arith.constant 1.000000e+00 : f32
    %343 = vector.broadcast %cst_178 : f32 to vector<2x128xf32>
    %344 = arith.addf %343, %342 : vector<2x128xf32>
    %345 = tpu.reciprocal %344 {approx = true} : vector<2x128xf32> -> vector<2x128xf32>
    %346 = arith.mulf %344, %345 : vector<2x128xf32>
    %cst_179 = arith.constant 2.000000e+00 : f32
    %347 = vector.broadcast %cst_179 : f32 to vector<2x128xf32>
    %348 = arith.subf %347, %346 : vector<2x128xf32>
    %349 = arith.mulf %345, %348 : vector<2x128xf32>
    %350 = arith.mulf %344, %349 : vector<2x128xf32>
    %cst_180 = arith.constant 2.000000e+00 : f32
    %351 = vector.broadcast %cst_180 : f32 to vector<2x128xf32>
    %352 = arith.subf %351, %350 : vector<2x128xf32>
    %353 = arith.mulf %349, %352 : vector<2x128xf32>
    %354 = arith.mulf %90, %353 : vector<2x128xf32>
    %c0_181 = arith.constant 0 : index
    %c0_182 = arith.constant 0 : index
    %c0_183 = arith.constant 0 : index
    %c0_184 = arith.constant 0 : index
    %355 = vector.load %arg9[%c0_181, %c0_182, %c0_183, %c0_184] : memref<1x4x2x128xf32, #tpu.memory_space<vmem>>, vector<1x1x2x128xf32>
    %356 = vector.shape_cast %355 : vector<1x1x2x128xf32> to vector<2x128xf32>
    %357 = vector.shape_cast %354 : vector<2x128xf32> to vector<1x1x2x128xf32>
    tpu.vector_store %arg9[%c0_181, %c0_182, %c0_183, %c0_184], %357 {strides = array<i32>} : memref<1x4x2x128xf32, #tpu.memory_space<vmem>>, vector<1x1x2x128xf32>,
    %358 = arith.mulf %92, %353 : vector<2x128xf32>
    %c0_185 = arith.constant 0 : index
    %c1_186 = arith.constant 1 : index
    %c0_187 = arith.constant 0 : index
    %c0_188 = arith.constant 0 : index
    %359 = vector.load %arg9[%c0_185, %c1_186, %c0_187, %c0_188] : memref<1x4x2x128xf32, #tpu.memory_space<vmem>>, vector<1x1x2x128xf32>
    %360 = vector.shape_cast %359 : vector<1x1x2x128xf32> to vector<2x128xf32>
    %361 = vector.shape_cast %358 : vector<2x128xf32> to vector<1x1x2x128xf32>
    tpu.vector_store %arg9[%c0_185, %c1_186, %c0_187, %c0_188], %361 {strides = array<i32>} : memref<1x4x2x128xf32, #tpu.memory_space<vmem>>, vector<1x1x2x128xf32>,
    %362 = arith.mulf %94, %353 : vector<2x128xf32>
    %c0_189 = arith.constant 0 : index
    %c2_190 = arith.constant 2 : index
    %c0_191 = arith.constant 0 : index
    %c0_192 = arith.constant 0 : index
    %363 = vector.load %arg9[%c0_189, %c2_190, %c0_191, %c0_192] : memref<1x4x2x128xf32, #tpu.memory_space<vmem>>, vector<1x1x2x128xf32>
    %364 = vector.shape_cast %363 : vector<1x1x2x128xf32> to vector<2x128xf32>
    %365 = vector.shape_cast %362 : vector<2x128xf32> to vector<1x1x2x128xf32>
    tpu.vector_store %arg9[%c0_189, %c2_190, %c0_191, %c0_192], %365 {strides = array<i32>} : memref<1x4x2x128xf32, #tpu.memory_space<vmem>>, vector<1x1x2x128xf32>,
    %366 = arith.mulf %96, %353 : vector<2x128xf32>
    %c0_193 = arith.constant 0 : index
    %c3_194 = arith.constant 3 : index
    %c0_195 = arith.constant 0 : index
    %c0_196 = arith.constant 0 : index
    %367 = vector.load %arg9[%c0_193, %c3_194, %c0_195, %c0_196] : memref<1x4x2x128xf32, #tpu.memory_space<vmem>>, vector<1x1x2x128xf32>
    %368 = vector.shape_cast %367 : vector<1x1x2x128xf32> to vector<2x128xf32>
    %369 = vector.shape_cast %366 : vector<2x128xf32> to vector<1x1x2x128xf32>
    tpu.vector_store %arg9[%c0_193, %c3_194, %c0_195, %c0_196], %369 {strides = array<i32>} : memref<1x4x2x128xf32, #tpu.memory_space<vmem>>, vector<1x1x2x128xf32>,
    return
  }
  func.func @transform_0(%arg0: i32, %arg1: i32) -> (i32, i32) {
    %c0_i32 = arith.constant 0 : i32
    %c0_i32_0 = arith.constant 0 : i32
    %c0_i32_1 = arith.constant 0 : i32
    return %c0_i32, %c0_i32_0 : i32, i32
  }
  func.func @transform_1(%arg0: i32, %arg1: i32) -> (i32, i32) {
    %c0_i32 = arith.constant 0 : i32
    %c0_i32_0 = arith.constant 0 : i32
    %c0_i32_1 = arith.constant 0 : i32
    return %c0_i32, %c0_i32_0 : i32, i32
  }
  func.func @transform_2(%arg0: i32, %arg1: i32) -> i32 {
    %c0_i32 = arith.constant 0 : i32
    %c0_i32_0 = arith.constant 0 : i32
    return %c0_i32 : i32
  }
  func.func @transform_3(%arg0: i32, %arg1: i32) -> i32 {
    %c0_i32 = arith.constant 0 : i32
    %c0_i32_0 = arith.constant 0 : i32
    return %c0_i32 : i32
  }
  func.func @transform_4(%arg0: i32, %arg1: i32) -> i32 {
    %c0_i32 = arith.constant 0 : i32
    %c0_i32_0 = arith.constant 0 : i32
    return %c0_i32 : i32
  }
  func.func @transform_5(%arg0: i32, %arg1: i32) -> (i32, i32, i32, i32) {
    %c0_i32 = arith.constant 0 : i32
    %c0_i32_0 = arith.constant 0 : i32
    %c0_i32_1 = arith.constant 0 : i32
    return %arg0, %c0_i32, %arg1, %c0_i32_0 : i32, i32, i32, i32
  }
  func.func @transform_6(%arg0: i32, %arg1: i32) -> (i32, i32, i32, i32) {
    %c0_i32 = arith.constant 0 : i32
    %c0_i32_0 = arith.constant 0 : i32
    %c0_i32_1 = arith.constant 0 : i32
    return %arg0, %c0_i32, %arg1, %c0_i32_0 : i32, i32, i32, i32
  }
  func.func @transform_7(%arg0: i32, %arg1: i32) -> (i32, i32, i32, i32) {
    %c0_i32 = arith.constant 0 : i32
    %c0_i32_0 = arith.constant 0 : i32
    %c0_i32_1 = arith.constant 0 : i32
    return %arg0, %c0_i32, %arg1, %c0_i32_0 : i32, i32, i32, i32
  }
}

</mosaic_0001>

<llo_original>
// kernel: attention_block_pallas.1
$region0: #{attention_block_pallas.1}
  #allocation0 [shape = 'u32[]', space=smem, size = 0x4, offset = 0x4, fixed_abs, tag = 'smem constant byte address 0x4 - core index']
  #allocation1 [shape = 'u32[144,128]{1,0:T(1,128)}', space=vmem, size = 0x12000, scoped, tag = 'internal scratch']
  #allocation2 [shape = 'f32[1]{0:T(128)S(6)}', space=smem, size = 0x200, scoped, tag = 'scoped memory for attention_block_pallas.1']
  %s0 = inlined_call_operand.vmem [shape: f32[4,8], index: 0, kind: input, shape index: {}]
  %s1 = inlined_call_operand.vmem [shape: f32[4,8], index: 1, kind: input, shape index: {}]
  %s2 = inlined_call_operand.vmem [shape: f32[8], index: 2, kind: input, shape index: {}]
  %s3 = inlined_call_operand.vmem [shape: f32[8], index: 3, kind: input, shape index: {}]
  %s4 = inlined_call_operand.<no memory space> [shape: f32[1], index: 4, kind: input, shape index: {}]
  %s5 = inlined_call_operand.vmem [shape: f32[2,4,2,128], index: 5, kind: input, shape index: {}]
  %s6 = inlined_call_operand.vmem [shape: f32[2,4,2,128], index: 6, kind: input, shape index: {}]
  %s7 = inlined_call_operand.vmem [shape: f32[2,4,2,128], index: 7, kind: output, shape index: {}]
  %s8 = sld [smem:[#allocation0]]
  $region77: #{attention_block_pallas.1} parent=0
    _
  %s10 = ssub.s32 1, %s8
  %s11 = scalar_select 0, %s10, %s8
  %12 = sst [smem:[#allocation2]] %s4
  $region1: #{attention_block_pallas.1} parent=0
    #allocation3 [shape = 'u8[2048]{0}', space=smem, size = 0x800, scoped, tag = 'input window, operand 0, single buffered']
    #allocation4 [shape = 's32[2]{0}', space=sflag, size = 0x8, scoped, tag = 'scoped memory for attention_block_pallas.1']
    #allocation5 [shape = 'u8[2048]{0}', space=smem, size = 0x800, scoped, tag = 'input window, operand 1, single buffered']
    #allocation6 [shape = 's32[1]{0}', space=sflag, size = 0x4, scoped, tag = 'scoped memory for attention_block_pallas.1']
    #allocation7 [shape = 'u8[512]{0}', space=smem, size = 0x200, scoped, tag = 'input window, operand 2, single buffered']
    #allocation8 [shape = 'u8[512]{0}', space=smem, size = 0x200, scoped, tag = 'input window, operand 3, single buffered']
    #allocation9 [shape = 's32[1]{0}', space=sflag, size = 0x4, scoped, tag = 'scoped memory for attention_block_pallas.1']
    %13 = vsyncpa [#allocation4], 0
    %14 = vsyncpa [#allocation6], 0
    %15 = vsyncpa [#allocation9], 0
    loop: start=0, step=1, limit=4
    $region2: #{attention_block_pallas.1} parent=1 // loop_pre_header
      _
    $region3: #{attention_block_pallas.1} parent=1 // loop_header
      %s17 = sphi 0, %s21
      %p18 = scmp.ge.s32.totalorder %s17, 4
      %s24 = sphi 0, %s36
      %s25 = sphi 0, %s32
      %s26 = sphi 0, %s24
      %s27 = sphi 0, %s25
      %s28 = sphi 0, %s26
      %s29 = sphi 0, %s27
      %s37 = sphi 0, %s37
      %s39 = sphi 0, %s37
      %s40 = sphi 0, %s39
      %s54 = sphi 0, %s40
      %s58 = sphi 0, %s58
      %s60 = sphi 0, %s58
      %s61 = sphi 0, %s60
      %s75 = sphi 0, %s61
      %s79 = sphi 0, %s79
      %s81 = sphi 0, %s79
      %s82 = sphi 0, %s81
      %s96 = sphi 0, %s82
      %s100 = sphi 0, %s100
      %s102 = sphi 0, %s100
      %s103 = sphi 0, %s102
      %s117 = sphi 0, %s103
      %s121 = sphi 0, %s121
      %s123 = sphi 0, %s121
      %s124 = sphi 0, %s123
      %s138 = sphi 0, %s124
      %s146 = sphi 0, %s148
      %s149 = sphi 0, %s146
      %s150 = sphi 0, %s149
      %s166 = sphi 0, %s150
      %s174 = sphi 0, %s176
      %s177 = sphi 0, %s174
      %s178 = sphi 0, %s177
      %s194 = sphi 0, %s178
      %s202 = sphi 0, %s204
      %s205 = sphi 0, %s202
      %s206 = sphi 0, %s205
      %s222 = sphi 0, %s206
    $region4: #{attention_block_pallas.1} parent=1 // loop_header_branch
      %20 = sbr.rel (%p18) target = $region8
    $region5: #{attention_block_pallas.1} parent=1 // loop_body
      %s22 = ssub.s32 %s17, 1
      %s23 = ssub.s32 %s17, 2
      %s30 = sadd.s32 1, %s25
      %p31 = scmp.ge.s32.totalorder %s30, 1
      %s32 = scalar_select %p31, 0, %s30
      %s33 = sadd.s32 1, %s24
      %s34 = scalar_select %p31, %s33, %s24
      %p35 = scmp.ge.s32.totalorder %s34, 2
      %s36 = scalar_select %p35, 0, %s34
      %s38 = sadd.s32 %s37, 1
      %p41 = scmp.eq.s32.totalorder %s17, 1
      %p42 = scmp.ne.s32.totalorder %s37, %s39
      %p43 = scmp.eq.s32.totalorder %s17, 0
      %p44 = por %p42, %p43
      %p45 = scmp.ne.s32.totalorder %s37, %s39
      %p46 = scmp.eq.s32.totalorder %s22, 1
      %p47 = por %p45, %p46
      %p48 = scmp.ne.s32.totalorder %s39, %s40
      %p49 = scmp.eq.s32.totalorder %s22, 0
      %p50 = por %p48, %p49
      %p51 = scmp.ne.s32.totalorder %s39, %s40
      %p52 = scmp.eq.s32.totalorder %s23, 1
      %p53 = por %p51, %p52
      %p55 = scmp.ne.s32.totalorder %s40, %s54
      %p56 = scmp.eq.s32.totalorder %s23, 0
      %p57 = por %p55, %p56
      %s59 = sadd.s32 %s58, 1
      %p62 = scmp.eq.s32.totalorder %s17, 1
      %p63 = scmp.ne.s32.totalorder %s58, %s60
      %p64 = scmp.eq.s32.totalorder %s17, 0
      %p65 = por %p63, %p64
      %p66 = scmp.ne.s32.totalorder %s58, %s60
      %p67 = scmp.eq.s32.totalorder %s22, 1
      %p68 = por %p66, %p67
      %p69 = scmp.ne.s32.totalorder %s60, %s61
      %p70 = scmp.eq.s32.totalorder %s22, 0
      %p71 = por %p69, %p70
      %p72 = scmp.ne.s32.totalorder %s60, %s61
      %p73 = scmp.eq.s32.totalorder %s23, 1
      %p74 = por %p72, %p73
      %p76 = scmp.ne.s32.totalorder %s61, %s75
      %p77 = scmp.eq.s32.totalorder %s23, 0
      %p78 = por %p76, %p77
      %s80 = sadd.s32 %s79, 1
      %p83 = scmp.eq.s32.totalorder %s17, 1
      %p84 = scmp.ne.s32.totalorder %s79, %s81
      %p85 = scmp.eq.s32.totalorder %s17, 0
      %p86 = por %p84, %p85
      %p87 = scmp.ne.s32.totalorder %s79, %s81
      %p88 = scmp.eq.s32.totalorder %s22, 1
      %p89 = por %p87, %p88
      %p90 = scmp.ne.s32.totalorder %s81, %s82
      %p91 = scmp.eq.s32.totalorder %s22, 0
      %p92 = por %p90, %p91
      %p93 = scmp.ne.s32.totalorder %s81, %s82
      %p94 = scmp.eq.s32.totalorder %s23, 1
      %p95 = por %p93, %p94
      %p97 = scmp.ne.s32.totalorder %s82, %s96
      %p98 = scmp.eq.s32.totalorder %s23, 0
      %p99 = por %p97, %p98
      %s101 = sadd.s32 %s100, 1
      %p104 = scmp.eq.s32.totalorder %s17, 1
      %p105 = scmp.ne.s32.totalorder %s100, %s102
      %p106 = scmp.eq.s32.totalorder %s17, 0
      %p107 = por %p105, %p106
      %p108 = scmp.ne.s32.totalorder %s100, %s102
      %p109 = scmp.eq.s32.totalorder %s22, 1
      %p110 = por %p108, %p109
      %p111 = scmp.ne.s32.totalorder %s102, %s103
      %p112 = scmp.eq.s32.totalorder %s22, 0
      %p113 = por %p111, %p112
      %p114 = scmp.ne.s32.totalorder %s102, %s103
      %p115 = scmp.eq.s32.totalorder %s23, 1
      %p116 = por %p114, %p115
      %p118 = scmp.ne.s32.totalorder %s103, %s117
      %p119 = scmp.eq.s32.totalorder %s23, 0
      %p120 = por %p118, %p119
      %s122 = sadd.s32 %s121, 1
      %p125 = scmp.eq.s32.totalorder %s17, 1
      %p126 = scmp.ne.s32.totalorder %s121, %s123
      %p127 = scmp.eq.s32.totalorder %s17, 0
      %p128 = por %p126, %p127
      %p129 = scmp.ne.s32.totalorder %s121, %s123
      %p130 = scmp.eq.s32.totalorder %s22, 1
      %p131 = por %p129, %p130
      %p132 = scmp.ne.s32.totalorder %s123, %s124
      %p133 = scmp.eq.s32.totalorder %s22, 0
      %p134 = por %p132, %p133
      %p135 = scmp.ne.s32.totalorder %s123, %s124
      %p136 = scmp.eq.s32.totalorder %s23, 1
      %p137 = por %p135, %p136
      %p139 = scmp.ne.s32.totalorder %s124, %s138
      %p140 = scmp.eq.s32.totalorder %s23, 0
      %p141 = por %p139, %p140
      %s142 = ssub.s32 %s24, %s36
      %s143 = ssub.s32 %s25, %s32
      %s144 = sor.u32 %s142, %s143
      %p145 = scmp.eq.s32.totalorder %s144, 0
      %s147 = sadd.s32 %s146, 1
      %s148 = scalar_select %p145, %s146, %s147
      %p151 = pneg %p145
      %p152 = scmp.eq.s32.totalorder %s17, 1
      %p153 = por %p151, %p152
      %p154 = scmp.ne.s32.totalorder %s146, %s149
      %p155 = scmp.eq.s32.totalorder %s17, 0
      %p156 = por %p154, %p155
      %p157 = scmp.ne.s32.totalorder %s146, %s149
      %p158 = scmp.eq.s32.totalorder %s22, 1
      %p159 = por %p157, %p158
      %p160 = scmp.ne.s32.totalorder %s149, %s150
      %p161 = scmp.eq.s32.totalorder %s22, 0
      %p162 = por %p160, %p161
      %p163 = scmp.ne.s32.totalorder %s149, %s150
      %p164 = scmp.eq.s32.totalorder %s23, 1
      %p165 = por %p163, %p164
      %p167 = scmp.ne.s32.totalorder %s150, %s166
      %p168 = scmp.eq.s32.totalorder %s23, 0
      %p169 = por %p167, %p168
      %s170 = ssub.s32 %s24, %s36
      %s171 = ssub.s32 %s25, %s32
      %s172 = sor.u32 %s170, %s171
      %p173 = scmp.eq.s32.totalorder %s172, 0
      %s175 = sadd.s32 %s174, 1
      %s176 = scalar_select %p173, %s174, %s175
      %p179 = pneg %p173
      %p180 = scmp.eq.s32.totalorder %s17, 1
      %p181 = por %p179, %p180
      %p182 = scmp.ne.s32.totalorder %s174, %s177
      %p183 = scmp.eq.s32.totalorder %s17, 0
      %p184 = por %p182, %p183
      %p185 = scmp.ne.s32.totalorder %s174, %s177
      %p186 = scmp.eq.s32.totalorder %s22, 1
      %p187 = por %p185, %p186
      %p188 = scmp.ne.s32.totalorder %s177, %s178
      %p189 = scmp.eq.s32.totalorder %s22, 0
      %p190 = por %p188, %p189
      %p191 = scmp.ne.s32.totalorder %s177, %s178
      %p192 = scmp.eq.s32.totalorder %s23, 1
      %p193 = por %p191, %p192
      %p195 = scmp.ne.s32.totalorder %s178, %s194
      %p196 = scmp.eq.s32.totalorder %s23, 0
      %p197 = por %p195, %p196
      %s198 = ssub.s32 %s24, %s36
      %s199 = ssub.s32 %s25, %s32
      %s200 = sor.u32 %s198, %s199
      %p201 = scmp.eq.s32.totalorder %s200, 0
      %s203 = sadd.s32 %s202, 1
      %s204 = scalar_select %p201, %s202, %s203
      %p207 = pneg %p201
      %p208 = scmp.eq.s32.totalorder %s17, 1
      %p209 = por %p207, %p208
      %p210 = scmp.ne.s32.totalorder %s202, %s205
      %p211 = scmp.eq.s32.totalorder %s17, 0
      %p212 = por %p210, %p211
      %p213 = scmp.ne.s32.totalorder %s202, %s205
      %p214 = scmp.eq.s32.totalorder %s22, 1
      %p215 = por %p213, %p214
      %p216 = scmp.ne.s32.totalorder %s205, %s206
      %p217 = scmp.eq.s32.totalorder %s22, 0
      %p218 = por %p216, %p217
      %p219 = scmp.ne.s32.totalorder %s205, %s206
      %p220 = scmp.eq.s32.totalorder %s23, 1
      %p221 = por %p219, %p220
      %p223 = scmp.ne.s32.totalorder %s206, %s222
      %p224 = scmp.eq.s32.totalorder %s23, 0
      %p225 = por %p223, %p224
      %p226 = scmp.le.s32.totalorder 1, %s17
      %p227 = scmp.lt.s32.totalorder %s17, 3
      %p228 = pnand %p226, %p227
      %p229 = pneg %p228
      // Predicated region
      $region9: #{attention_block_pallas.1} parent=5 // pred_check
        _
      $region10: #{attention_block_pallas.1} parent=5 // pred_check_branch
        %231 = sbr.rel (%p228) target = $region12
      $region11: #{attention_block_pallas.1} parent=5 // pred_region
        %s232 = ssub.s32 %s17, 1
        // Predicated region
        $region13: #{attention_block_pallas.1} parent=11 // pred_check
          %p233 = pneg %p50
        $region14: #{attention_block_pallas.1} parent=11 // pred_check_branch
          %235 = sbr.rel (%p233) target = $region16
        $region15: #{attention_block_pallas.1} parent=11 // pred_region
          %s237 = ssub.s32 64, 64
          %238 = vsyncadd [#allocation4], %s237
          %s240 = sshll.u32 %s0, 4
          %s241 = int_to_ptr.vmem [resolvable:$true] %s240
          %243 = dma.vmem_to_smem %s241, 64, [#allocation3], [#allocation4]
        $region16: #{attention_block_pallas.1} parent=11 // pred_fallthru
          _
        // Predicated region
        $region17: #{attention_block_pallas.1} parent=11 // pred_check
          %p244 = pneg %p71
        $region18: #{attention_block_pallas.1} parent=11 // pred_check_branch
          %246 = sbr.rel (%p244) target = $region20
        $region19: #{attention_block_pallas.1} parent=11 // pred_region
          %s248 = ssub.s32 64, 64
          %249 = vsyncadd [#allocation6], %s248
          %s251 = sshll.u32 %s1, 4
          %s252 = int_to_ptr.vmem [resolvable:$true] %s251
          %254 = dma.vmem_to_smem %s252, 64, [#allocation5], [#allocation6]
        $region20: #{attention_block_pallas.1} parent=11 // pred_fallthru
          _
        // Predicated region
        $region21: #{attention_block_pallas.1} parent=11 // pred_check
          %p255 = pneg %p92
        $region22: #{attention_block_pallas.1} parent=11 // pred_check_branch
          %257 = sbr.rel (%p255) target = $region24
        $region23: #{attention_block_pallas.1} parent=11 // pred_region
          %s259 = ssub.s32 16, 16
          %260 = vsyncadd [#allocation6], %s259
          %s262 = sshll.u32 %s2, 4
          %s263 = int_to_ptr.vmem [resolvable:$true] %s262
          %265 = dma.vmem_to_smem %s263, 16, [#allocation7], [#allocation6]
        $region24: #{attention_block_pallas.1} parent=11 // pred_fallthru
          _
        // Predicated region
        $region25: #{attention_block_pallas.1} parent=11 // pred_check
          %p266 = pneg %p113
        $region26: #{attention_block_pallas.1} parent=11 // pred_check_branch
          %268 = sbr.rel (%p266) target = $region28
        $region27: #{attention_block_pallas.1} parent=11 // pred_region
          %s270 = ssub.s32 16, 16
          %271 = vsyncadd [#allocation9], %s270
          %s273 = sshll.u32 %s3, 4
          %s274 = int_to_ptr.vmem [resolvable:$true] %s273
          %276 = dma.vmem_to_smem %s274, 16, [#allocation8], [#allocation9]
        $region28: #{attention_block_pallas.1} parent=11 // pred_fallthru
          _
        // Predicated region
        $region29: #{attention_block_pallas.1} parent=11 // pred_check
          %p277 = pneg %p134
        $region30: #{attention_block_pallas.1} parent=11 // pred_check_branch
          %279 = sbr.rel (%p277) target = $region32
        $region31: #{attention_block_pallas.1} parent=11 // pred_region
          _
        $region32: #{attention_block_pallas.1} parent=11 // pred_fallthru
          _
      $region12: #{attention_block_pallas.1} parent=5 // pred_fallthru
        _
      %p280 = scmp.lt.s32.totalorder %s17, 2
      // Predicated region
      $region33: #{attention_block_pallas.1} parent=5 // pred_check
        %p281 = pneg %p280
      $region34: #{attention_block_pallas.1} parent=5 // pred_check_branch
        %283 = sbr.rel (%p281) target = $region36
      $region35: #{attention_block_pallas.1} parent=5 // pred_region
        // Predicated region
        $region37: #{attention_block_pallas.1} parent=35 // pred_check
          %p284 = pneg %p156
        $region38: #{attention_block_pallas.1} parent=35 // pred_check_branch
          %286 = sbr.rel (%p284) target = $region40
        $region39: #{attention_block_pallas.1} parent=35 // pred_region
          %p287 = scmp.lt.s32.totalorder %s24, 1
          %s288 = scalar_select %p287, %s24, 1
          %p289 = scmp.lt.s32.totalorder %s25, 0
          %s290 = scalar_select %p289, %s25, 0
          %s291 = smul.addr %s288, 4
          %s292 = sadd.s32 %s290, %s291
          %s293 = smul.addr %s292, 2
          %s294 = scalar_lea.vmem %s5, %s293
        $region40: #{attention_block_pallas.1} parent=35 // pred_fallthru
          _
        // Predicated region
        $region41: #{attention_block_pallas.1} parent=35 // pred_check
          %p295 = pneg %p184
        $region42: #{attention_block_pallas.1} parent=35 // pred_check_branch
          %297 = sbr.rel (%p295) target = $region44
        $region43: #{attention_block_pallas.1} parent=35 // pred_region
          %p298 = scmp.lt.s32.totalorder %s24, 1
          %s299 = scalar_select %p298, %s24, 1
          %p300 = scmp.lt.s32.totalorder %s25, 0
          %s301 = scalar_select %p300, %s25, 0
          %s302 = smul.addr %s299, 4
          %s303 = sadd.s32 %s301, %s302
          %s304 = smul.addr %s303, 2
          %s305 = scalar_lea.vmem %s6, %s304
        $region44: #{attention_block_pallas.1} parent=35 // pred_fallthru
          _
      $region36: #{attention_block_pallas.1} parent=5 // pred_fallthru
        _
      %p306 = scmp.le.s32.totalorder 1, %s17
      %p307 = scmp.lt.s32.totalorder %s17, 3
      %p308 = pnand %p306, %p307
      %p309 = pneg %p308
      // Predicated region
      $region45: #{attention_block_pallas.1} parent=5 // pred_check
        _
      $region46: #{attention_block_pallas.1} parent=5 // pred_check_branch
        %311 = sbr.rel (%p308) target = $region48
      $region47: #{attention_block_pallas.1} parent=5 // pred_region
        %s312 = ssub.s32 %s17, 1
        // Predicated region
        $region49: #{attention_block_pallas.1} parent=47 // pred_check
          %p313 = pneg %p50
        $region50: #{attention_block_pallas.1} parent=47 // pred_check_branch
          %315 = sbr.rel (%p313) target = $region52
        $region51: #{attention_block_pallas.1} parent=47 // pred_region
          %316 = dma.done [#allocation4], 64
        $region52: #{attention_block_pallas.1} parent=47 // pred_fallthru
          _
        // Predicated region
        $region53: #{attention_block_pallas.1} parent=47 // pred_check
          %p317 = pneg %p71
        $region54: #{attention_block_pallas.1} parent=47 // pred_check_branch
          %319 = sbr.rel (%p317) target = $region56
        $region55: #{attention_block_pallas.1} parent=47 // pred_region
          %320 = dma.done [#allocation6], 64
        $region56: #{attention_block_pallas.1} parent=47 // pred_fallthru
          _
        // Predicated region
        $region57: #{attention_block_pallas.1} parent=47 // pred_check
          %p321 = pneg %p92
        $region58: #{attention_block_pallas.1} parent=47 // pred_check_branch
          %323 = sbr.rel (%p321) target = $region60
        $region59: #{attention_block_pallas.1} parent=47 // pred_region
          %324 = dma.done [#allocation6], 16
        $region60: #{attention_block_pallas.1} parent=47 // pred_fallthru
          _
        // Predicated region
        $region61: #{attention_block_pallas.1} parent=47 // pred_check
          %p325 = pneg %p113
        $region62: #{attention_block_pallas.1} parent=47 // pred_check_branch
          %327 = sbr.rel (%p325) target = $region64
        $region63: #{attention_block_pallas.1} parent=47 // pred_region
          %328 = dma.done [#allocation9], 16
        $region64: #{attention_block_pallas.1} parent=47 // pred_fallthru
          _
        %329 = sfence
        %p330 = pneg %p50
        %p331 = pneg %p47
        %p332 = pneg %p71
        %p333 = pneg %p68
        %p334 = pneg %p92
        %p335 = pneg %p89
        %p336 = pneg %p113
        %p337 = pneg %p110
        %p338 = pneg %p134
        %p339 = pneg %p131
        %p340 = scmp.lt.s32.totalorder %s26, 1
        %s341 = scalar_select %p340, %s26, 1
        %p342 = scmp.lt.s32.totalorder %s27, 0
        %s343 = scalar_select %p342, %s27, 0
        %s344 = smul.addr %s341, 4
        %s345 = sadd.s32 %s343, %s344
        %s346 = smul.addr %s345, 2
        %s347 = scalar_lea.vmem %s5, %s346
        %p348 = pneg %p162
        %p349 = pneg %p159
        %p350 = scmp.lt.s32.totalorder %s26, 1
        %s351 = scalar_select %p350, %s26, 1
        %p352 = scmp.lt.s32.totalorder %s27, 0
        %s353 = scalar_select %p352, %s27, 0
        %s354 = smul.addr %s351, 4
        %s355 = sadd.s32 %s353, %s354
        %s356 = smul.addr %s355, 2
        %s357 = scalar_lea.vmem %s6, %s356
        %p358 = pneg %p190
        %p359 = pneg %p187
        %p360 = pneg %p218
        %p361 = pneg %p215
        %p362 = scmp.lt.s32.totalorder %s26, 1
        %s363 = scalar_select %p362, %s26, 1
        %p364 = scmp.lt.s32.totalorder %s27, 0
        %s365 = scalar_select %p364, %s27, 0
        %s366 = smul.addr %s363, 4
        %s367 = sadd.s32 %s365, %s366
        %s368 = smul.addr %s367, 2
        %s369 = scalar_lea.vmem %s7, %s368
        %p370 = scmp.lt.s32.totalorder %s26, 1
        %s371 = scalar_select %p370, %s26, 1
        %p372 = scmp.lt.s32.totalorder %s27, 0
        %s373 = scalar_select %p372, %s27, 0
        %s374 = smul.addr %s371, 4
        %s375 = sadd.s32 %s373, %s374
        %s376 = smul.addr %s375, 2
        %s377 = scalar_lea.vmem %s5, %s376
        %p378 = scmp.lt.s32.totalorder %s26, 1
        %s379 = scalar_select %p378, %s26, 1
        %p380 = scmp.lt.s32.totalorder %s27, 0
        %s381 = scalar_select %p380, %s27, 0
        %s382 = smul.addr %s379, 4
        %s383 = sadd.s32 %s381, %s382
        %s384 = smul.addr %s383, 2
        %s385 = scalar_lea.vmem %s6, %s384
        %p386 = scmp.lt.s32.totalorder %s26, 1
        %s387 = scalar_select %p386, %s26, 1
        %p388 = scmp.lt.s32.totalorder %s27, 0
        %s389 = scalar_select %p388, %s27, 0
        %s390 = smul.addr %s387, 4
        %s391 = sadd.s32 %s389, %s390
        %s392 = smul.addr %s391, 2
        %s393 = scalar_lea.vmem %s7, %s392
        %s394 = sld [smem:[#allocation3]]
        %s395 = sld [smem:[#allocation3 + $0x1]]
        %s396 = sld [smem:[#allocation3 + $0x2]]
        %s397 = sld [smem:[#allocation3 + $0x3]]
        %s398 = sld [smem:[#allocation3 + $0x4]]
        %s399 = sld [smem:[#allocation3 + $0x5]]
        %s400 = sld [smem:[#allocation3 + $0x6]]
        %s401 = sld [smem:[#allocation3 + $0x7]]
        %s402 = sld [smem:[#allocation3 + $0x80]]
        %s403 = sld [smem:[#allocation3 + $0x81]]
        %s404 = sld [smem:[#allocation3 + $0x82]]
        %s405 = sld [smem:[#allocation3 + $0x83]]
        %s406 = sld [smem:[#allocation3 + $0x84]]
        %s407 = sld [smem:[#allocation3 + $0x85]]
        %s408 = sld [smem:[#allocation3 + $0x86]]
        %s409 = sld [smem:[#allocation3 + $0x87]]
        %s410 = sld [smem:[#allocation3 + $0x100]]
        %s411 = sld [smem:[#allocation3 + $0x101]]
        %s412 = sld [smem:[#allocation3 + $0x102]]
        %s413 = sld [smem:[#allocation3 + $0x103]]
        %s414 = sld [smem:[#allocation3 + $0x104]]
        %s415 = sld [smem:[#allocation3 + $0x105]]
        %s416 = sld [smem:[#allocation3 + $0x106]]
        %s417 = sld [smem:[#allocation3 + $0x107]]
        %s418 = sld [smem:[#allocation3 + $0x180]]
        %s419 = sld [smem:[#allocation3 + $0x181]]
        %s420 = sld [smem:[#allocation3 + $0x182]]
        %s421 = sld [smem:[#allocation3 + $0x183]]
        %s422 = sld [smem:[#allocation3 + $0x184]]
        %s423 = sld [smem:[#allocation3 + $0x185]]
        %s424 = sld [smem:[#allocation3 + $0x186]]
        %s425 = sld [smem:[#allocation3 + $0x187]]
        %s426 = sld [smem:[#allocation5]]
        %s427 = sld [smem:[#allocation5 + $0x1]]
        %s428 = sld [smem:[#allocation5 + $0x2]]
        %s429 = sld [smem:[#allocation5 + $0x3]]
        %s430 = sld [smem:[#allocation5 + $0x4]]
        %s431 = sld [smem:[#allocation5 + $0x5]]
        %s432 = sld [smem:[#allocation5 + $0x6]]
        %s433 = sld [smem:[#allocation5 + $0x7]]
        %s434 = sld [smem:[#allocation5 + $0x80]]
        %s435 = sld [smem:[#allocation5 + $0x81]]
        %s436 = sld [smem:[#allocation5 + $0x82]]
        %s437 = sld [smem:[#allocation5 + $0x83]]
        %s438 = sld [smem:[#allocation5 + $0x84]]
        %s439 = sld [smem:[#allocation5 + $0x85]]
        %s440 = sld [smem:[#allocation5 + $0x86]]
        %s441 = sld [smem:[#allocation5 + $0x87]]
        %s442 = sld [smem:[#allocation5 + $0x100]]
        %s443 = sld [smem:[#allocation5 + $0x101]]
        %s444 = sld [smem:[#allocation5 + $0x102]]
        %s445 = sld [smem:[#allocation5 + $0x103]]
        %s446 = sld [smem:[#allocation5 + $0x104]]
        %s447 = sld [smem:[#allocation5 + $0x105]]
        %s448 = sld [smem:[#allocation5 + $0x106]]
        %s449 = sld [smem:[#allocation5 + $0x107]]
        %s450 = sld [smem:[#allocation5 + $0x180]]
        %s451 = sld [smem:[#allocation5 + $0x181]]
        %s452 = sld [smem:[#allocation5 + $0x182]]
        %s453 = sld [smem:[#allocation5 + $0x183]]
        %s454 = sld [smem:[#allocation5 + $0x184]]
        %s455 = sld [smem:[#allocation5 + $0x185]]
        %s456 = sld [smem:[#allocation5 + $0x186]]
        %s457 = sld [smem:[#allocation5 + $0x187]]
        %s458 = sld [smem:[#allocation7]]
        %s459 = sld [smem:[#allocation7 + $0x1]]
        %s460 = sld [smem:[#allocation7 + $0x2]]
        %s461 = sld [smem:[#allocation7 + $0x3]]
        %s462 = sld [smem:[#allocation7 + $0x4]]
        %s463 = sld [smem:[#allocation7 + $0x5]]
        %s464 = sld [smem:[#allocation7 + $0x6]]
        %s465 = sld [smem:[#allocation7 + $0x7]]
        %s466 = sld [smem:[#allocation8]]
        %s467 = sld [smem:[#allocation8 + $0x1]]
        %s468 = sld [smem:[#allocation8 + $0x2]]
        %s469 = sld [smem:[#allocation8 + $0x3]]
        %s470 = sld [smem:[#allocation8 + $0x4]]
        %s471 = sld [smem:[#allocation8 + $0x5]]
        %s472 = sld [smem:[#allocation8 + $0x6]]
        %s473 = sld [smem:[#allocation8 + $0x7]]
        %s474 = sld [smem:[#allocation2]]
        %v475 = vld [vmem:[%s377] sm:$0x3]
        %s476 = scalar_lea.vmem %s377, 2
        %v477 = vld [vmem:[%s476] sm:$0x3]
        %s478 = scalar_lea.vmem %s377, 4
        %v479 = vld [vmem:[%s478] sm:$0x3]
        %s480 = scalar_lea.vmem %s377, 6
        %v481 = vld [vmem:[%s480] sm:$0x3]
        %v482 = vld [vmem:[%s385] sm:$0x3]
        %s483 = scalar_lea.vmem %s385, 2
        %v484 = vld [vmem:[%s483] sm:$0x3]
        %s485 = scalar_lea.vmem %s385, 4
        %v486 = vld [vmem:[%s485] sm:$0x3]
        %s487 = scalar_lea.vmem %s385, 6
        %v488 = vld [vmem:[%s487] sm:$0x3]
        %v489 = vstv %s474
        %v490 = vstv %s394
        %v491 = vmul.f32 %v475, %v490
        %v492 = vstv %s402
        %v493 = vmul.f32 %v477, %v492
        %v494 = vadd.f32 %v491, %v493
        %v495 = vstv %s410
        %v496 = vmul.f32 %v479, %v495
        %v497 = vadd.f32 %v494, %v496
        %v498 = vstv %s418
        %v499 = vmul.f32 %v481, %v498
        %v500 = vadd.f32 %v497, %v499
        %v501 = vstv %s426
        %v502 = vmul.f32 %v482, %v501
        %v503 = vadd.f32 %v500, %v502
        %v504 = vstv %s434
        %v505 = vmul.f32 %v484, %v504
        %v506 = vadd.f32 %v503, %v505
        %v507 = vstv %s442
        %v508 = vmul.f32 %v486, %v507
        %v509 = vadd.f32 %v506, %v508
        %v510 = vstv %s450
        %v511 = vmul.f32 %v488, %v510
        %v512 = vadd.f32 %v509, %v511
        %v513 = vstv %s458
        %v514 = vadd.f32 %v512, %v513
        %v515 = vmax.f32 %v514, 0.0
        %v516 = vstv %s466
        %v517 = vmul.f32 %v515, %v516
        %v518 = vadd.f32 %v489, %v517
        %v519 = vstv %s395
        %v520 = vmul.f32 %v475, %v519
        %v521 = vstv %s403
        %v522 = vmul.f32 %v477, %v521
        %v523 = vadd.f32 %v520, %v522
        %v524 = vstv %s411
        %v525 = vmul.f32 %v479, %v524
        %v526 = vadd.f32 %v523, %v525
        %v527 = vstv %s419
        %v528 = vmul.f32 %v481, %v527
        %v529 = vadd.f32 %v526, %v528
        %v530 = vstv %s427
        %v531 = vmul.f32 %v482, %v530
        %v532 = vadd.f32 %v529, %v531
        %v533 = vstv %s435
        %v534 = vmul.f32 %v484, %v533
        %v535 = vadd.f32 %v532, %v534
        %v536 = vstv %s443
        %v537 = vmul.f32 %v486, %v536
        %v538 = vadd.f32 %v535, %v537
        %v539 = vstv %s451
        %v540 = vmul.f32 %v488, %v539
        %v541 = vadd.f32 %v538, %v540
        %v542 = vstv %s459
        %v543 = vadd.f32 %v541, %v542
        %v544 = vmax.f32 %v543, 0.0
        %v545 = vstv %s467
        %v546 = vmul.f32 %v544, %v545
        %v547 = vadd.f32 %v518, %v546
        %v548 = vstv %s396
        %v549 = vmul.f32 %v475, %v548
        %v550 = vstv %s404
        %v551 = vmul.f32 %v477, %v550
        %v552 = vadd.f32 %v549, %v551
        %v553 = vstv %s412
        %v554 = vmul.f32 %v479, %v553
        %v555 = vadd.f32 %v552, %v554
        %v556 = vstv %s420
        %v557 = vmul.f32 %v481, %v556
        %v558 = vadd.f32 %v555, %v557
        %v559 = vstv %s428
        %v560 = vmul.f32 %v482, %v559
        %v561 = vadd.f32 %v558, %v560
        %v562 = vstv %s436
        %v563 = vmul.f32 %v484, %v562
        %v564 = vadd.f32 %v561, %v563
        %v565 = vstv %s444
        %v566 = vmul.f32 %v486, %v565
        %v567 = vadd.f32 %v564, %v566
        %v568 = vstv %s452
        %v569 = vmul.f32 %v488, %v568
        %v570 = vadd.f32 %v567, %v569
        %v571 = vstv %s460
        %v572 = vadd.f32 %v570, %v571
        %v573 = vmax.f32 %v572, 0.0
        %v574 = vstv %s468
        %v575 = vmul.f32 %v573, %v574
        %v576 = vadd.f32 %v547, %v575
        %v577 = vstv %s397
        %v578 = vmul.f32 %v475, %v577
        %v579 = vstv %s405
        %v580 = vmul.f32 %v477, %v579
        %v581 = vadd.f32 %v578, %v580
        %v582 = vstv %s413
        %v583 = vmul.f32 %v479, %v582
        %v584 = vadd.f32 %v581, %v583
        %v585 = vstv %s421
        %v586 = vmul.f32 %v481, %v585
        %v587 = vadd.f32 %v584, %v586
        %v588 = vstv %s429
        %v589 = vmul.f32 %v482, %v588
        %v590 = vadd.f32 %v587, %v589
        %v591 = vstv %s437
        %v592 = vmul.f32 %v484, %v591
        %v593 = vadd.f32 %v590, %v592
        %v594 = vstv %s445
        %v595 = vmul.f32 %v486, %v594
        %v596 = vadd.f32 %v593, %v595
        %v597 = vstv %s453
        %v598 = vmul.f32 %v488, %v597
        %v599 = vadd.f32 %v596, %v598
        %v600 = vstv %s461
        %v601 = vadd.f32 %v599, %v600
        %v602 = vmax.f32 %v601, 0.0
        %v603 = vstv %s469
        %v604 = vmul.f32 %v602, %v603
        %v605 = vadd.f32 %v576, %v604
        %v606 = vstv %s398
        %v607 = vmul.f32 %v475, %v606
        %v608 = vstv %s406
        %v609 = vmul.f32 %v477, %v608
        %v610 = vadd.f32 %v607, %v609
        %v611 = vstv %s414
        %v612 = vmul.f32 %v479, %v611
        %v613 = vadd.f32 %v610, %v612
        %v614 = vstv %s422
        %v615 = vmul.f32 %v481, %v614
        %v616 = vadd.f32 %v613, %v615
        %v617 = vstv %s430
        %v618 = vmul.f32 %v482, %v617
        %v619 = vadd.f32 %v616, %v618
        %v620 = vstv %s438
        %v621 = vmul.f32 %v484, %v620
        %v622 = vadd.f32 %v619, %v621
        %v623 = vstv %s446
        %v624 = vmul.f32 %v486, %v623
        %v625 = vadd.f32 %v622, %v624
        %v626 = vstv %s454
        %v627 = vmul.f32 %v488, %v626
        %v628 = vadd.f32 %v625, %v627
        %v629 = vstv %s462
        %v630 = vadd.f32 %v628, %v629
        %v631 = vmax.f32 %v630, 0.0
        %v632 = vstv %s470
        %v633 = vmul.f32 %v631, %v632
        %v634 = vadd.f32 %v605, %v633
        %v635 = vstv %s399
        %v636 = vmul.f32 %v475, %v635
        %v637 = vstv %s407
        %v638 = vmul.f32 %v477, %v637
        %v639 = vadd.f32 %v636, %v638
        %v640 = vstv %s415
        %v641 = vmul.f32 %v479, %v640
        %v642 = vadd.f32 %v639, %v641
        %v643 = vstv %s423
        %v644 = vmul.f32 %v481, %v643
        %v645 = vadd.f32 %v642, %v644
        %v646 = vstv %s431
        %v647 = vmul.f32 %v482, %v646
        %v648 = vadd.f32 %v645, %v647
        %v649 = vstv %s439
        %v650 = vmul.f32 %v484, %v649
        %v651 = vadd.f32 %v648, %v650
        %v652 = vstv %s447
        %v653 = vmul.f32 %v486, %v652
        %v654 = vadd.f32 %v651, %v653
        %v655 = vstv %s455
        %v656 = vmul.f32 %v488, %v655
        %v657 = vadd.f32 %v654, %v656
        %v658 = vstv %s463
        %v659 = vadd.f32 %v657, %v658
        %v660 = vmax.f32 %v659, 0.0
        %v661 = vstv %s471
        %v662 = vmul.f32 %v660, %v661
        %v663 = vadd.f32 %v634, %v662
        %v664 = vstv %s400
        %v665 = vmul.f32 %v475, %v664
        %v666 = vstv %s408
        %v667 = vmul.f32 %v477, %v666
        %v668 = vadd.f32 %v665, %v667
        %v669 = vstv %s416
        %v670 = vmul.f32 %v479, %v669
        %v671 = vadd.f32 %v668, %v670
        %v672 = vstv %s424
        %v673 = vmul.f32 %v481, %v672
        %v674 = vadd.f32 %v671, %v673
        %v675 = vstv %s432
        %v676 = vmul.f32 %v482, %v675
        %v677 = vadd.f32 %v674, %v676
        %v678 = vstv %s440
        %v679 = vmul.f32 %v484, %v678
        %v680 = vadd.f32 %v677, %v679
        %v681 = vstv %s448
        %v682 = vmul.f32 %v486, %v681
        %v683 = vadd.f32 %v680, %v682
        %v684 = vstv %s456
        %v685 = vmul.f32 %v488, %v684
        %v686 = vadd.f32 %v683, %v685
        %v687 = vstv %s464
        %v688 = vadd.f32 %v686, %v687
        %v689 = vmax.f32 %v688, 0.0
        %v690 = vstv %s472
        %v691 = vmul.f32 %v689, %v690
        %v692 = vadd.f32 %v663, %v691
        %v693 = vstv %s401
        %v694 = vmul.f32 %v475, %v693
        %v695 = vstv %s409
        %v696 = vmul.f32 %v477, %v695
        %v697 = vadd.f32 %v694, %v696
        %v698 = vstv %s417
        %v699 = vmul.f32 %v479, %v698
        %v700 = vadd.f32 %v697, %v699
        %v701 = vstv %s425
        %v702 = vmul.f32 %v481, %v701
        %v703 = vadd.f32 %v700, %v702
        %v704 = vstv %s433
        %v705 = vmul.f32 %v482, %v704
        %v706 = vadd.f32 %v703, %v705
        %v707 = vstv %s441
        %v708 = vmul.f32 %v484, %v707
        %v709 = vadd.f32 %v706, %v708
        %v710 = vstv %s449
        %v711 = vmul.f32 %v486, %v710
        %v712 = vadd.f32 %v709, %v711
        %v713 = vstv %s457
        %v714 = vmul.f32 %v488, %v713
        %v715 = vadd.f32 %v712, %v714
        %v716 = vstv %s465
        %v717 = vadd.f32 %v715, %v716
        %v718 = vmax.f32 %v717, 0.0
        %v719 = vstv %s473
        %v720 = vmul.f32 %v718, %v719
        %v721 = vadd.f32 %v692, %v720
        %v722 = vmax.f32 %v721, -80.0
        %v723 = vsub.f32 0.0, %v722
        %v724 = vmul.f32 %v723, 1.442695
        %v725 = vpow.pop %v724
        %v726 = vadd.f32 %v725, 1.0
        %v727 = vrcp.pop %v726
        %v728 = vmul.f32 %v726, %v727
        %v729 = vsub.f32 2.0, %v728
        %v730 = vmul.f32 %v727, %v729
        %v731 = vmul.f32 %v726, %v730
        %v732 = vsub.f32 2.0, %v731
        %v733 = vmul.f32 %v730, %v732
        %v734 = vmul.f32 %v482, %v733
        %735 = vst [vmem:[%s393] sm:$0x3] %v734
        %v736 = vmul.f32 %v484, %v733
        %s737 = scalar_lea.vmem %s393, 2
        %738 = vst [vmem:[%s737] sm:$0x3] %v736
        %v739 = vmul.f32 %v486, %v733
        %s740 = scalar_lea.vmem %s393, 4
        %741 = vst [vmem:[%s740] sm:$0x3] %v739
        %v742 = vmul.f32 %v488, %v733
        %s743 = scalar_lea.vmem %s393, 6
        %744 = vst [vmem:[%s743] sm:$0x3] %v742
        %p745 = scmp.lt.s32.totalorder %s26, 1
        %s746 = scalar_select %p745, %s26, 1
        %p747 = scmp.lt.s32.totalorder %s27, 0
        %s748 = scalar_select %p747, %s27, 0
        %s749 = smul.addr %s746, 4
        %s750 = sadd.s32 %s748, %s749
        %s751 = smul.addr %s750, 2
        %s752 = scalar_lea.vmem %s7, %s751
        // Predicated region
        $region65: #{attention_block_pallas.1} parent=47 // pred_check
          %p753 = pneg %p215
        $region66: #{attention_block_pallas.1} parent=47 // pred_check_branch
          %755 = sbr.rel (%p753) target = $region68
        $region67: #{attention_block_pallas.1} parent=47 // pred_region
          _
        $region68: #{attention_block_pallas.1} parent=47 // pred_fallthru
          _
      $region48: #{attention_block_pallas.1} parent=5 // pred_fallthru
        _
      %p756 = scmp.le.s32.totalorder 2, %s17
      // Predicated region
      $region69: #{attention_block_pallas.1} parent=5 // pred_check
        %p757 = pneg %p756
      $region70: #{attention_block_pallas.1} parent=5 // pred_check_branch
        %759 = sbr.rel (%p757) target = $region72
      $region71: #{attention_block_pallas.1} parent=5 // pred_region
        %s760 = ssub.s32 %s17, 2
        // Predicated region
        $region73: #{attention_block_pallas.1} parent=71 // pred_check
          %p761 = pneg %p221
        $region74: #{attention_block_pallas.1} parent=71 // pred_check_branch
          %763 = sbr.rel (%p761) target = $region76
        $region75: #{attention_block_pallas.1} parent=71 // pred_region
          %p764 = scmp.lt.s32.totalorder %s28, 1
          %s765 = scalar_select %p764, %s28, 1
          %p766 = scmp.lt.s32.totalorder %s29, 0
          %s767 = scalar_select %p766, %s29, 0
          %s768 = smul.addr %s765, 4
          %s769 = sadd.s32 %s767, %s768
          %s770 = smul.addr %s769, 2
          %s771 = scalar_lea.vmem %s7, %s770
        $region76: #{attention_block_pallas.1} parent=71 // pred_fallthru
          _
      $region72: #{attention_block_pallas.1} parent=5 // pred_fallthru
        _
    $region6: #{attention_block_pallas.1} parent=1 // loop_footer
      %s21 = sadd.s32 1, %s17
    $region7: #{attention_block_pallas.1} parent=1 // loop_footer_branch
      %16 = sbr.rel target = $region3
    $region8: #{attention_block_pallas.1} parent=1 // loop_exit
      _
    %772 = vsyncpa [#allocation4], 1
    %s773 = scalar_lea.sflag [#allocation4], 1
    %774 = vsyncpa %s773, 1
    %775 = vsyncpa [#allocation6], 1
    %776 = vsyncpa [#allocation9], 1

</llo_original>
